<compile_context>
chip_gen: v6e
topology: v6e:2x2x1
jax: 0.10.0
libtpu: 0.0.40
codegen_flags: <defaults>
</compile_context>

<pallas_src>
import functools

import jax
import jax.numpy as jnp
from jax.experimental import pallas as pl
from jax.experimental.pallas import tpu as pltpu

F_IN = 28 * 28   # 784
HIDDEN = 256
OUT = 10
OUT_PAD = 128    # lane-dense output stores; sliced back to 10 in the wrapper


def _round_up(x, m):
    return ((x + m - 1) // m) * m


def densedd_kernel(x_ref, w0_ref, wd1_ref, wd2_ref, wd3_ref, wd4_ref, w5_ref,
                   o_ref):
    # x tile: (tb, 784) f32 -> bf16 inside the kernel (VPU cast, hidden under
    # the MXU).  Matmuls run on the MXU with bf16 operands and f32
    # accumulation; the gated-residual update g*c + c stays in f32 so error
    # does not compound across the four blocks.
    x = x_ref[...].astype(jnp.bfloat16)
    c = jnp.dot(x, w0_ref[...], preferred_element_type=jnp.float32)   # (tb,256)

    h = c
    for wd_ref in (wd1_ref, wd2_ref, wd3_ref, wd4_ref):
        g = jnp.dot(h.astype(jnp.bfloat16), wd_ref[...],
                    preferred_element_type=jnp.float32)
        h = g * c + c                                                  # f32

    o_ref[...] = jnp.dot(h.astype(jnp.bfloat16), w5_ref[...],
                         preferred_element_type=jnp.float32
                         ).astype(o_ref.dtype)                         # (tb,128)


def prepare_params(w0, wd1, wd2, wd3, wd4, w5):
    """One-time weight prep (call once, reuse across forward calls).

    Casts to bf16 and zero-pads fc2's output dim 10 -> 128 for lane-dense
    stores (padding columns sliced away in the wrapper).  Weights must be in
    (in_features, out_features) layout, i.e. transposed vs. nn.Linear storage.
    """
    assert w0.shape == (F_IN, HIDDEN), w0.shape
    for w in (wd1, wd2, wd3, wd4):
        assert w.shape == (HIDDEN, HIDDEN), w.shape
    assert w5.shape == (HIDDEN, OUT), w5.shape

    w5_p = jnp.zeros((HIDDEN, OUT_PAD), jnp.bfloat16).at[:, :OUT].set(
        w5.astype(jnp.bfloat16))
    return (w0.astype(jnp.bfloat16),
            wd1.astype(jnp.bfloat16), wd2.astype(jnp.bfloat16),
            wd3.astype(jnp.bfloat16), wd4.astype(jnp.bfloat16),
            w5_p)


@functools.partial(jax.jit, static_argnames=("block_b",))
def densedd_forward(x, w0, wd1, wd2, wd3, wd4, w5, *, block_b=512):
    """x: (B, 784) f32; weights as produced by prepare_params()."""
    B = x.shape[0]
    assert x.shape == (B, F_IN), x.shape

    # Batch tile: multiple of 16 (bf16 sublane packing).  For large batches,
    # keep >= 4 grid steps so v7x's two TensorCores both get work (never
    # shrinking below 256 rows).  If one tile would cover the whole batch,
    # use exactly B rows: a block equal to the full dim is always legal and
    # avoids any batch padding / ragged handling.
    tb = min(block_b, _round_up(B, 16))
    if B >= 1024:
        tb = min(tb, max(256, _round_up(pl.cdiv(B, 4), 16)))
    if tb >= B:
        tb = B

    # Weights: constant index_map -> DMA'd once, VMEM-resident across tiles.
    # (VMEM headroom is ample at block_b<=1024, so default double-buffering
    # of the ~1 MB of weights is left alone rather than using pl.Buffered(1).)
    weight_spec = lambda shape: pl.BlockSpec(shape, lambda i: (0, 0))

    out_padded = pl.pallas_call(
        densedd_kernel,
        out_shape=jax.ShapeDtypeStruct((B, OUT_PAD), jnp.bfloat16),
        grid=(pl.cdiv(B, tb),),
        in_specs=[
            # x: last block dim == full 784-wide feature dim (no padding).
            pl.BlockSpec((tb, F_IN), lambda i: (i, 0)),
            weight_spec((F_IN, HIDDEN)),
            weight_spec((HIDDEN, HIDDEN)),
            weight_spec((HIDDEN, HIDDEN)),
            weight_spec((HIDDEN, HIDDEN)),
            weight_spec((HIDDEN, HIDDEN)),
            weight_spec((HIDDEN, OUT_PAD)),
        ],
        out_specs=pl.BlockSpec((tb, OUT_PAD), lambda i: (i, 0)),
        compiler_params=pltpu.CompilerParams(
            dimension_semantics=("parallel",),
            # Above v5e's 16 MiB default so block_b can be raised; equals the
            # v6e/v7x defaults, so harmless there.
            vmem_limit_bytes=32 * 1024 * 1024),
    )(x, w0, wd1, wd2, wd3, wd4, w5)

    return out_padded[:, :OUT]


def init_params(key):
    """Deterministic parameter init.

    Weights are created directly in (in_features, out_features) layout,
    i.e. already transposed relative to PyTorch's nn.Linear storage.
    """
    ks = jax.random.split(key, 6)

    def w(k, fan_in, fan_out):
        bound = 1.0 / jnp.sqrt(fan_in)
        return jax.random.uniform(k, (fan_in, fan_out), jnp.float32,
                                  minval=-bound, maxval=bound)

    w0 = w(ks[0], F_IN, HIDDEN)     # fc0
    wd1 = w(ks[1], HIDDEN, HIDDEN)  # dd
    wd2 = w(ks[2], HIDDEN, HIDDEN)  # dd2
    wd3 = w(ks[3], HIDDEN, HIDDEN)  # dd3
    wd4 = w(ks[4], HIDDEN, HIDDEN)  # dd4
    w5 = w(ks[5], HIDDEN, OUT)      # fc2
    return w0, wd1, wd2, wd3, wd4, w5


def reference_forward(x, w0, wd1, wd2, wd3, wd4, w5):
    """Pure-JAX f32 reference mirroring the PyTorch module."""
    c = x @ w0
    h = c
    for wd in (wd1, wd2, wd3, wd4):
        g = h @ wd
        h = g * c + c
    return h @ w5


if __name__ == "__main__":
    key = jax.random.PRNGKey(0)
    kx, kp = jax.random.split(key)

    B = 8  # small batch; flattened MNIST-style input of 28*28 = 784 features
    x = jax.random.normal(kx, (B, F_IN), jnp.float32)
    params = init_params(kp)
    prepared = prepare_params(*params)   # one-time weight cast/pad (hoisted)

    out = jax.block_until_ready(densedd_forward(x, *prepared))

    ref = reference_forward(x, *params)
    assert out.shape == (B, OUT), out.shape
    out_f32 = out.astype(jnp.float32)
    max_err = float(jnp.max(jnp.abs(out_f32 - ref)))
    # bf16 matmul operands + bf16 output store (f32 accumulation) -> loosened
    # tolerance vs the f32 reference.
    assert jnp.allclose(out_f32, ref, atol=5e-2, rtol=5e-2), max_err

    print("KERNEL_OK")
</pallas_src>

<mosaic_0001>
module attributes {stable_mosaic.version = 11 : i64} {
  func.func @densedd_kernel(%arg0: i32, %arg1: memref<8x784xf32, #tpu.memory_space<vmem>>, %arg2: memref<784x256xbf16, #tpu.memory_space<vmem>>, %arg3: memref<256x256xbf16, #tpu.memory_space<vmem>>, %arg4: memref<256x256xbf16, #tpu.memory_space<vmem>>, %arg5: memref<256x256xbf16, #tpu.memory_space<vmem>>, %arg6: memref<256x256xbf16, #tpu.memory_space<vmem>>, %arg7: memref<256x128xbf16, #tpu.memory_space<vmem>>, %arg8: memref<8x128xbf16, #tpu.memory_space<vmem>>) attributes {dimension_semantics = [#tpu.dimension_semantics<parallel>], iteration_bounds = array<i64: 1>, scalar_prefetch = 0 : i64, scratch_operands = 0 : i64, tpu.core_type = #tpu.core_type<tc>, window_params = [{transform_indices = @transform_0, window_bounds = array<i64: 8, 784>}, {pipeline_mode = #tpu.pipeline_mode<synchronous>, transform_indices = @transform_1, window_bounds = array<i64: 784, 256>}, {pipeline_mode = #tpu.pipeline_mode<synchronous>, transform_indices = @transform_2, window_bounds = array<i64: 256, 256>}, {pipeline_mode = #tpu.pipeline_mode<synchronous>, transform_indices = @transform_3, window_bounds = array<i64: 256, 256>}, {pipeline_mode = #tpu.pipeline_mode<synchronous>, transform_indices = @transform_4, window_bounds = array<i64: 256, 256>}, {pipeline_mode = #tpu.pipeline_mode<synchronous>, transform_indices = @transform_5, window_bounds = array<i64: 256, 256>}, {pipeline_mode = #tpu.pipeline_mode<synchronous>, transform_indices = @transform_6, window_bounds = array<i64: 256, 128>}, {transform_indices = @transform_7, window_bounds = array<i64: 8, 128>}]} {
    %c0 = arith.constant 0 : index
    %c0_0 = arith.constant 0 : index
    %0 = vector.load %arg1[%c0, %c0_0] : memref<8x784xf32, #tpu.memory_space<vmem>>, vector<8x784xf32>
    %1 = arith.truncf %0 : vector<8x784xf32> to vector<8x784xbf16>
    %c0_1 = arith.constant 0 : index
    %c0_2 = arith.constant 0 : index
    %2 = vector.load %arg2[%c0_1, %c0_2] : memref<784x256xbf16, #tpu.memory_space<vmem>>, vector<784x256xbf16>
    %cst = arith.constant dense<0.000000e+00> : vector<8x256xf32>
    %3 = tpu.matmul %1, %2, %cst {dimension_numbers = #tpu.dot_dimension_numbers<[1], [0], [0], [1], [0, 0, 1, 1], [], []>} : vector<8x784xbf16>, vector<784x256xbf16>, vector<8x256xf32> -> vector<8x256xf32>
    %4 = arith.truncf %3 : vector<8x256xf32> to vector<8x256xbf16>
    %c0_3 = arith.constant 0 : index
    %c0_4 = arith.constant 0 : index
    %5 = vector.load %arg3[%c0_3, %c0_4] : memref<256x256xbf16, #tpu.memory_space<vmem>>, vector<256x256xbf16>
    %cst_5 = arith.constant dense<0.000000e+00> : vector<8x256xf32>
    %6 = tpu.matmul %4, %5, %cst_5 {dimension_numbers = #tpu.dot_dimension_numbers<[1], [0], [0], [1], [0, 0, 1, 1], [], []>} : vector<8x256xbf16>, vector<256x256xbf16>, vector<8x256xf32> -> vector<8x256xf32>
    %7 = arith.mulf %6, %3 : vector<8x256xf32>
    %8 = arith.addf %7, %3 : vector<8x256xf32>
    %9 = arith.truncf %8 : vector<8x256xf32> to vector<8x256xbf16>
    %c0_6 = arith.constant 0 : index
    %c0_7 = arith.constant 0 : index
    %10 = vector.load %arg4[%c0_6, %c0_7] : memref<256x256xbf16, #tpu.memory_space<vmem>>, vector<256x256xbf16>
    %cst_8 = arith.constant dense<0.000000e+00> : vector<8x256xf32>
    %11 = tpu.matmul %9, %10, %cst_8 {dimension_numbers = #tpu.dot_dimension_numbers<[1], [0], [0], [1], [0, 0, 1, 1], [], []>} : vector<8x256xbf16>, vector<256x256xbf16>, vector<8x256xf32> -> vector<8x256xf32>
    %12 = arith.mulf %11, %3 : vector<8x256xf32>
    %13 = arith.addf %12, %3 : vector<8x256xf32>
    %14 = arith.truncf %13 : vector<8x256xf32> to vector<8x256xbf16>
    %c0_9 = arith.constant 0 : index
    %c0_10 = arith.constant 0 : index
    %15 = vector.load %arg5[%c0_9, %c0_10] : memref<256x256xbf16, #tpu.memory_space<vmem>>, vector<256x256xbf16>
    %cst_11 = arith.constant dense<0.000000e+00> : vector<8x256xf32>
    %16 = tpu.matmul %14, %15, %cst_11 {dimension_numbers = #tpu.dot_dimension_numbers<[1], [0], [0], [1], [0, 0, 1, 1], [], []>} : vector<8x256xbf16>, vector<256x256xbf16>, vector<8x256xf32> -> vector<8x256xf32>
    %17 = arith.mulf %16, %3 : vector<8x256xf32>
    %18 = arith.addf %17, %3 : vector<8x256xf32>
    %19 = arith.truncf %18 : vector<8x256xf32> to vector<8x256xbf16>
    %c0_12 = arith.constant 0 : index
    %c0_13 = arith.constant 0 : index
    %20 = vector.load %arg6[%c0_12, %c0_13] : memref<256x256xbf16, #tpu.memory_space<vmem>>, vector<256x256xbf16>
    %cst_14 = arith.constant dense<0.000000e+00> : vector<8x256xf32>
    %21 = tpu.matmul %19, %20, %cst_14 {dimension_numbers = #tpu.dot_dimension_numbers<[1], [0], [0], [1], [0, 0, 1, 1], [], []>} : vector<8x256xbf16>, vector<256x256xbf16>, vector<8x256xf32> -> vector<8x256xf32>
    %22 = arith.mulf %21, %3 : vector<8x256xf32>
    %23 = arith.addf %22, %3 : vector<8x256xf32>
    %24 = arith.truncf %23 : vector<8x256xf32> to vector<8x256xbf16>
    %c0_15 = arith.constant 0 : index
    %c0_16 = arith.constant 0 : index
    %25 = vector.load %arg7[%c0_15, %c0_16] : memref<256x128xbf16, #tpu.memory_space<vmem>>, vector<256x128xbf16>
    %cst_17 = arith.constant dense<0.000000e+00> : vector<8x128xf32>
    %26 = tpu.matmul %24, %25, %cst_17 {dimension_numbers = #tpu.dot_dimension_numbers<[1], [0], [0], [1], [0, 0, 1, 1], [], []>} : vector<8x256xbf16>, vector<256x128xbf16>, vector<8x128xf32> -> vector<8x128xf32>
    %27 = arith.truncf %26 : vector<8x128xf32> to vector<8x128xbf16>
    %c0_18 = arith.constant 0 : index
    %c0_19 = arith.constant 0 : index
    %28 = vector.load %arg8[%c0_18, %c0_19] : memref<8x128xbf16, #tpu.memory_space<vmem>>, vector<8x128xbf16>
    tpu.vector_store %arg8[%c0_18, %c0_19], %27 {strides = array<i32>} : memref<8x128xbf16, #tpu.memory_space<vmem>>, vector<8x128xbf16>,
    return
  }
  func.func @transform_0(%arg0: i32) -> (i32, i32) {
    %c0_i32 = arith.constant 0 : i32
    %c0_i32_0 = arith.constant 0 : i32
    return %arg0, %c0_i32 : i32, i32
  }
  func.func @transform_1(%arg0: i32) -> (i32, i32) {
    %c0_i32 = arith.constant 0 : i32
    %c0_i32_0 = arith.constant 0 : i32
    %c0_i32_1 = arith.constant 0 : i32
    return %c0_i32, %c0_i32_0 : i32, i32
  }
  func.func @transform_2(%arg0: i32) -> (i32, i32) {
    %c0_i32 = arith.constant 0 : i32
    %c0_i32_0 = arith.constant 0 : i32
    %c0_i32_1 = arith.constant 0 : i32
    return %c0_i32, %c0_i32_0 : i32, i32
  }
  func.func @transform_3(%arg0: i32) -> (i32, i32) {
    %c0_i32 = arith.constant 0 : i32
    %c0_i32_0 = arith.constant 0 : i32
    %c0_i32_1 = arith.constant 0 : i32
    return %c0_i32, %c0_i32_0 : i32, i32
  }
  func.func @transform_4(%arg0: i32) -> (i32, i32) {
    %c0_i32 = arith.constant 0 : i32
    %c0_i32_0 = arith.constant 0 : i32
    %c0_i32_1 = arith.constant 0 : i32
    return %c0_i32, %c0_i32_0 : i32, i32
  }
  func.func @transform_5(%arg0: i32) -> (i32, i32) {
    %c0_i32 = arith.constant 0 : i32
    %c0_i32_0 = arith.constant 0 : i32
    %c0_i32_1 = arith.constant 0 : i32
    return %c0_i32, %c0_i32_0 : i32, i32
  }
  func.func @transform_6(%arg0: i32) -> (i32, i32) {
    %c0_i32 = arith.constant 0 : i32
    %c0_i32_0 = arith.constant 0 : i32
    %c0_i32_1 = arith.constant 0 : i32
    return %c0_i32, %c0_i32_0 : i32, i32
  }
  func.func @transform_7(%arg0: i32) -> (i32, i32) {
    %c0_i32 = arith.constant 0 : i32
    %c0_i32_0 = arith.constant 0 : i32
    return %arg0, %c0_i32 : i32, i32
  }
}

</mosaic_0001>

<llo_original>
// kernel: densedd_forward.1
$region0: #{densedd_forward.1}
  #allocation0 [shape = 'u32[]', space=smem, size = 0x4, offset = 0x4, fixed_abs, tag = 'smem constant byte address 0x4 - core index']
  #allocation1 [shape = 'u32[144,128]{1,0:T(1,128)}', space=vmem, size = 0x12000, scoped, tag = 'internal scratch']
  %s0 = inlined_call_operand.hbm [shape: f32[8,784], index: 0, kind: input, shape index: {}]
  %s1 = inlined_call_operand.hbm [shape: bf16[784,256], index: 1, kind: input, shape index: {}]
  %s2 = inlined_call_operand.hbm [shape: bf16[256,256], index: 2, kind: input, shape index: {}]
  %s3 = inlined_call_operand.hbm [shape: bf16[256,256], index: 3, kind: input, shape index: {}]
  %s4 = inlined_call_operand.hbm [shape: bf16[256,256], index: 4, kind: input, shape index: {}]
  %s5 = inlined_call_operand.hbm [shape: bf16[256,256], index: 5, kind: input, shape index: {}]
  %s6 = inlined_call_operand.hbm [shape: bf16[256,128], index: 6, kind: input, shape index: {}]
  %s7 = inlined_call_operand.hbm [shape: bf16[8,128], index: 7, kind: output, shape index: {}]
  %s8 = sld [smem:[#allocation0]]
  $region66: #{densedd_forward.1} parent=0
    _
  %s10 = ssub.s32 1, %s8
  %s11 = scalar_select 0, %s10, %s8
  $region1: #{densedd_forward.1} parent=0
    #allocation2 [shape = 'u8[28672]{0}', space=vmem, size = 0x7000, scoped, tag = 'input window, operand 0, single buffered']
    #allocation3 [shape = 's32[1]{0}', space=sflag, size = 0x4, scoped, tag = 'scoped memory for densedd_forward.1']
    #allocation4 [shape = 's32[1]{0}', space=sflag, size = 0x4, scoped, tag = 'scoped memory for densedd_forward.1']
    #allocation5 [shape = 'u8[401408]{0}', space=vmem, size = 0x62000, scoped, tag = 'input window, operand 1, single buffered']
    #allocation6 [shape = 's32[1]{0}', space=sflag, size = 0x4, scoped, tag = 'scoped memory for densedd_forward.1']
    #allocation7 [shape = 'u8[131072]{0}', space=vmem, size = 0x20000, scoped, tag = 'input window, operand 2, single buffered']
    #allocation8 [shape = 'u8[131072]{0}', space=vmem, size = 0x20000, scoped, tag = 'input window, operand 3, single buffered']
    #allocation9 [shape = 's32[1]{0}', space=sflag, size = 0x4, scoped, tag = 'scoped memory for densedd_forward.1']
    #allocation10 [shape = 'u8[131072]{0}', space=vmem, size = 0x20000, scoped, tag = 'input window, operand 4, single buffered']
    #allocation11 [shape = 'u8[131072]{0}', space=vmem, size = 0x20000, scoped, tag = 'input window, operand 5, single buffered']
    #allocation12 [shape = 's32[1]{0}', space=sflag, size = 0x4, scoped, tag = 'scoped memory for densedd_forward.1']
    #allocation13 [shape = 'u8[65536]{0}', space=vmem, size = 0x10000, scoped, tag = 'input window, operand 6, single buffered']
    #allocation14 [shape = 'u8[2048]{0}', space=vmem, size = 0x800, scoped, tag = 'output window, operand 0, single buffered']
    %12 = vsyncpa [#allocation3], 0
    %13 = vsyncpa [#allocation6], 0
    %14 = vsyncpa [#allocation9], 0
    %15 = vsyncpa [#allocation12], 0
    %16 = vsyncpa [#allocation4], 0
    // Predicated region
    $region2: #{densedd_forward.1} parent=1 // pred_check
      _
    $region3: #{densedd_forward.1} parent=1 // pred_check_branch
      %18 = sbr.rel (0) target = $region5
    $region4: #{densedd_forward.1} parent=1 // pred_region
      %s20 = ssub.s32 896, 896
      %21 = vsyncadd [#allocation3], %s20
      %s23 = sshll.u32 [#allocation2], 4
      %s24 = int_to_ptr.vmem [resolvable:$true] %s23
      %26 = dma.hbm_to_vmem [thread:$0]  %s0, 896, %s24, [#allocation3]
    $region5: #{densedd_forward.1} parent=1 // pred_fallthru
      _
    // Predicated region
    $region6: #{densedd_forward.1} parent=1 // pred_check
      _
    $region7: #{densedd_forward.1} parent=1 // pred_check_branch
      %28 = sbr.rel (0) target = $region9
    $region8: #{densedd_forward.1} parent=1 // pred_region
      %s30 = ssub.s32 12544, 12544
      %31 = vsyncadd [#allocation6], %s30
      %s32 = sshll.u32 [#allocation5], 4
      %s33 = int_to_ptr.vmem [resolvable:$true] %s32
      %38 = dma.hbm_to_vmem [thread:$0]  %s1, 12544, %s33, [#allocation6], 128, 128, 8
    $region9: #{densedd_forward.1} parent=1 // pred_fallthru
      _
    // Predicated region
    $region10: #{densedd_forward.1} parent=1 // pred_check
      _
    $region11: #{densedd_forward.1} parent=1 // pred_check_branch
      %40 = sbr.rel (0) target = $region13
    $region12: #{densedd_forward.1} parent=1 // pred_region
      %s42 = ssub.s32 4096, 4096
      %43 = vsyncadd [#allocation6], %s42
      %s44 = sshll.u32 [#allocation7], 4
      %s45 = int_to_ptr.vmem [resolvable:$true] %s44
      %50 = dma.hbm_to_vmem [thread:$0]  %s2, 4096, %s45, [#allocation6], 128, 128, 8
    $region13: #{densedd_forward.1} parent=1 // pred_fallthru
      _
    // Predicated region
    $region14: #{densedd_forward.1} parent=1 // pred_check
      _
    $region15: #{densedd_forward.1} parent=1 // pred_check_branch
      %52 = sbr.rel (0) target = $region17
    $region16: #{densedd_forward.1} parent=1 // pred_region
      %s54 = ssub.s32 4096, 4096
      %55 = vsyncadd [#allocation9], %s54
      %s56 = sshll.u32 [#allocation8], 4
      %s57 = int_to_ptr.vmem [resolvable:$true] %s56
      %62 = dma.hbm_to_vmem [thread:$0]  %s3, 4096, %s57, [#allocation9], 128, 128, 8
    $region17: #{densedd_forward.1} parent=1 // pred_fallthru
      _
    // Predicated region
    $region18: #{densedd_forward.1} parent=1 // pred_check
      _
    $region19: #{densedd_forward.1} parent=1 // pred_check_branch
      %64 = sbr.rel (0) target = $region21
    $region20: #{densedd_forward.1} parent=1 // pred_region
      %s66 = ssub.s32 4096, 4096
      %67 = vsyncadd [#allocation9], %s66
      %s68 = sshll.u32 [#allocation10], 4
      %s69 = int_to_ptr.vmem [resolvable:$true] %s68
      %74 = dma.hbm_to_vmem [thread:$0]  %s4, 4096, %s69, [#allocation9], 128, 128, 8
    $region21: #{densedd_forward.1} parent=1 // pred_fallthru
      _
    // Predicated region
    $region22: #{densedd_forward.1} parent=1 // pred_check
      _
    $region23: #{densedd_forward.1} parent=1 // pred_check_branch
      %76 = sbr.rel (0) target = $region25
    $region24: #{densedd_forward.1} parent=1 // pred_region
      %s78 = ssub.s32 4096, 4096
      %79 = vsyncadd [#allocation12], %s78
      %s80 = sshll.u32 [#allocation11], 4
      %s81 = int_to_ptr.vmem [resolvable:$true] %s80
      %86 = dma.hbm_to_vmem [thread:$0]  %s5, 4096, %s81, [#allocation12], 128, 128, 8
    $region25: #{densedd_forward.1} parent=1 // pred_fallthru
      _
    // Predicated region
    $region26: #{densedd_forward.1} parent=1 // pred_check
      _
    $region27: #{densedd_forward.1} parent=1 // pred_check_branch
      %88 = sbr.rel (0) target = $region29
    $region28: #{densedd_forward.1} parent=1 // pred_region
      %s90 = ssub.s32 2048, 2048
      %91 = vsyncadd [#allocation12], %s90
      %s92 = sshll.u32 [#allocation13], 4
      %s93 = int_to_ptr.vmem [resolvable:$true] %s92
      %98 = dma.hbm_to_vmem [thread:$0]  %s6, 2048, %s93, [#allocation12], 64, 64, 4
    $region29: #{densedd_forward.1} parent=1 // pred_fallthru
      _
    // Predicated region
    $region30: #{densedd_forward.1} parent=1 // pred_check
      _
    $region31: #{densedd_forward.1} parent=1 // pred_check_branch
      %100 = sbr.rel (0) target = $region33
    $region32: #{densedd_forward.1} parent=1 // pred_region
      %101 = dma.done [#allocation3], 896
    $region33: #{densedd_forward.1} parent=1 // pred_fallthru
      _
    // Predicated region
    $region34: #{densedd_forward.1} parent=1 // pred_check
      _
    $region35: #{densedd_forward.1} parent=1 // pred_check_branch
      %103 = sbr.rel (0) target = $region37
    $region36: #{densedd_forward.1} parent=1 // pred_region
      %104 = dma.done [#allocation6], 12544
    $region37: #{densedd_forward.1} parent=1 // pred_fallthru
      _
    // Predicated region
    $region38: #{densedd_forward.1} parent=1 // pred_check
      _
    $region39: #{densedd_forward.1} parent=1 // pred_check_branch
      %106 = sbr.rel (0) target = $region41
    $region40: #{densedd_forward.1} parent=1 // pred_region
      %107 = dma.done [#allocation6], 4096
    $region41: #{densedd_forward.1} parent=1 // pred_fallthru
      _
    // Predicated region
    $region42: #{densedd_forward.1} parent=1 // pred_check
      _
    $region43: #{densedd_forward.1} parent=1 // pred_check_branch
      %109 = sbr.rel (0) target = $region45
    $region44: #{densedd_forward.1} parent=1 // pred_region
      %110 = dma.done [#allocation9], 4096
    $region45: #{densedd_forward.1} parent=1 // pred_fallthru
      _
    // Predicated region
    $region46: #{densedd_forward.1} parent=1 // pred_check
      _
    $region47: #{densedd_forward.1} parent=1 // pred_check_branch
      %112 = sbr.rel (0) target = $region49
    $region48: #{densedd_forward.1} parent=1 // pred_region
      %113 = dma.done [#allocation9], 4096
    $region49: #{densedd_forward.1} parent=1 // pred_fallthru
      _
    // Predicated region
    $region50: #{densedd_forward.1} parent=1 // pred_check
      _
    $region51: #{densedd_forward.1} parent=1 // pred_check_branch
      %115 = sbr.rel (0) target = $region53
    $region52: #{densedd_forward.1} parent=1 // pred_region
      %116 = dma.done [#allocation12], 4096
    $region53: #{densedd_forward.1} parent=1 // pred_fallthru
      _
    // Predicated region
    $region54: #{densedd_forward.1} parent=1 // pred_check
      _
    $region55: #{densedd_forward.1} parent=1 // pred_check_branch
      %118 = sbr.rel (0) target = $region57
    $region56: #{densedd_forward.1} parent=1 // pred_region
      %119 = dma.done [#allocation12], 2048
    $region57: #{densedd_forward.1} parent=1 // pred_fallthru
      _
    %v121 = vld [vmem:[#allocation2] sm:$0xff]
    %v122 = vld [vmem:[#allocation2 + $0x8] sm:$0xff]
    %v123 = vld [vmem:[#allocation2 + $0x10] sm:$0xff]
    %v124 = vld [vmem:[#allocation2 + $0x18] sm:$0xff]
    %v125 = vld [vmem:[#allocation2 + $0x20] sm:$0xff]
    %v126 = vld [vmem:[#allocation2 + $0x28] sm:$0xff]
    %v127 = vld [vmem:[#allocation2 + $0x30] sm:$0xff]
    %v128 = vpack.c.bf16 %v121, %v121
    %v129 = vpack.c.bf16 %v122, %v122
    %v130 = vpack.c.bf16 %v123, %v123
    %v131 = vpack.c.bf16 %v124, %v124
    %v132 = vpack.c.bf16 %v125, %v125
    %v133 = vpack.c.bf16 %v126, %v126
    %v134 = vpack.c.bf16 %v127, %v127
    %v135 = vld [vmem:[#allocation5] sm:$0xff]
    %v136 = vld [vmem:[#allocation5 + $0x8] sm:$0xff]
    %v137 = vld [vmem:[#allocation5 + $0x10] sm:$0xff]
    %v138 = vld [vmem:[#allocation5 + $0x18] sm:$0xff]
    %v139 = vld [vmem:[#allocation5 + $0x20] sm:$0xff]
    %v140 = vld [vmem:[#allocation5 + $0x28] sm:$0xff]
    %v141 = vld [vmem:[#allocation5 + $0x30] sm:$0xff]
    %v142 = vld [vmem:[#allocation5 + $0x38] sm:$0xff]
    %v143 = vld [vmem:[#allocation5 + $0x40] sm:$0xff]
    %v144 = vld [vmem:[#allocation5 + $0x48] sm:$0xff]
    %v145 = vld [vmem:[#allocation5 + $0x50] sm:$0xff]
    %v146 = vld [vmem:[#allocation5 + $0x58] sm:$0xff]
    %v147 = vld [vmem:[#allocation5 + $0x60] sm:$0xff]
    %v148 = vld [vmem:[#allocation5 + $0x68] sm:$0xff]
    %v149 = vld [vmem:[#allocation5 + $0x70] sm:$0xff]
    %v150 = vld [vmem:[#allocation5 + $0x78] sm:$0xff]
    %v151 = vld [vmem:[#allocation5 + $0x80] sm:$0xff]
    %v152 = vld [vmem:[#allocation5 + $0x88] sm:$0xff]
    %v153 = vld [vmem:[#allocation5 + $0x90] sm:$0xff]
    %v154 = vld [vmem:[#allocation5 + $0x98] sm:$0xff]
    %v155 = vld [vmem:[#allocation5 + $0xa0] sm:$0xff]
    %v156 = vld [vmem:[#allocation5 + $0xa8] sm:$0xff]
    %v157 = vld [vmem:[#allocation5 + $0xb0] sm:$0xff]
    %v158 = vld [vmem:[#allocation5 + $0xb8] sm:$0xff]
    %v159 = vld [vmem:[#allocation5 + $0xc0] sm:$0xff]
    %v160 = vld [vmem:[#allocation5 + $0xc8] sm:$0xff]
    %v161 = vld [vmem:[#allocation5 + $0xd0] sm:$0xff]
    %v162 = vld [vmem:[#allocation5 + $0xd8] sm:$0xff]
    %v163 = vld [vmem:[#allocation5 + $0xe0] sm:$0xff]
    %v164 = vld [vmem:[#allocation5 + $0xe8] sm:$0xff]
    %v165 = vld [vmem:[#allocation5 + $0xf0] sm:$0xff]
    %v166 = vld [vmem:[#allocation5 + $0xf8] sm:$0xff]
    %v167 = vld [vmem:[#allocation5 + $0x100] sm:$0xff]
    %v168 = vld [vmem:[#allocation5 + $0x108] sm:$0xff]
    %v169 = vld [vmem:[#allocation5 + $0x110] sm:$0xff]
    %v170 = vld [vmem:[#allocation5 + $0x118] sm:$0xff]
    %v171 = vld [vmem:[#allocation5 + $0x120] sm:$0xff]
    %v172 = vld [vmem:[#allocation5 + $0x128] sm:$0xff]
    %v173 = vld [vmem:[#allocation5 + $0x130] sm:$0xff]
    %v174 = vld [vmem:[#allocation5 + $0x138] sm:$0xff]
    %v175 = vld [vmem:[#allocation5 + $0x140] sm:$0xff]
    %v176 = vld [vmem:[#allocation5 + $0x148] sm:$0xff]
    %v177 = vld [vmem:[#allocation5 + $0x150] sm:$0xff]
    %v178 = vld [vmem:[#allocation5 + $0x158] sm:$0xff]
    %v179 = vld [vmem:[#allocation5 + $0x160] sm:$0xff]
    %v180 = vld [vmem:[#allocation5 + $0x168] sm:$0xff]
    %v181 = vld [vmem:[#allocation5 + $0x170] sm:$0xff]
    %v182 = vld [vmem:[#allocation5 + $0x178] sm:$0xff]
    %v183 = vld [vmem:[#allocation5 + $0x180] sm:$0xff]
    %v184 = vld [vmem:[#allocation5 + $0x188] sm:$0xff]
    %v185 = vld [vmem:[#allocation5 + $0x190] sm:$0xff]
    %v186 = vld [vmem:[#allocation5 + $0x198] sm:$0xff]
    %v187 = vld [vmem:[#allocation5 + $0x1a0] sm:$0xff]
    %v188 = vld [vmem:[#allocation5 + $0x1a8] sm:$0xff]
    %v189 = vld [vmem:[#allocation5 + $0x1b0] sm:$0xff]
    %v190 = vld [vmem:[#allocation5 + $0x1b8] sm:$0xff]
    %v191 = vld [vmem:[#allocation5 + $0x1c0] sm:$0xff]
    %v192 = vld [vmem:[#allocation5 + $0x1c8] sm:$0xff]
    %v193 = vld [vmem:[#allocation5 + $0x1d0] sm:$0xff]
    %v194 = vld [vmem:[#allocation5 + $0x1d8] sm:$0xff]
    %v195 = vld [vmem:[#allocation5 + $0x1e0] sm:$0xff]
    %v196 = vld [vmem:[#allocation5 + $0x1e8] sm:$0xff]
    %v197 = vld [vmem:[#allocation5 + $0x1f0] sm:$0xff]
    %v198 = vld [vmem:[#allocation5 + $0x1f8] sm:$0xff]
    %v199 = vld [vmem:[#allocation5 + $0x200] sm:$0xff]
    %v200 = vld [vmem:[#allocation5 + $0x208] sm:$0xff]
    %v201 = vld [vmem:[#allocation5 + $0x210] sm:$0xff]
    %v202 = vld [vmem:[#allocation5 + $0x218] sm:$0xff]
    %v203 = vld [vmem:[#allocation5 + $0x220] sm:$0xff]
    %v204 = vld [vmem:[#allocation5 + $0x228] sm:$0xff]
    %v205 = vld [vmem:[#allocation5 + $0x230] sm:$0xff]
    %v206 = vld [vmem:[#allocation5 + $0x238] sm:$0xff]
    %v207 = vld [vmem:[#allocation5 + $0x240] sm:$0xff]
    %v208 = vld [vmem:[#allocation5 + $0x248] sm:$0xff]
    %v209 = vld [vmem:[#allocation5 + $0x250] sm:$0xff]
    %v210 = vld [vmem:[#allocation5 + $0x258] sm:$0xff]
    %v211 = vld [vmem:[#allocation5 + $0x260] sm:$0xff]
    %v212 = vld [vmem:[#allocation5 + $0x268] sm:$0xff]
    %v213 = vld [vmem:[#allocation5 + $0x270] sm:$0xff]
    %v214 = vld [vmem:[#allocation5 + $0x278] sm:$0xff]
    %v215 = vld [vmem:[#allocation5 + $0x280] sm:$0xff]
    %v216 = vld [vmem:[#allocation5 + $0x288] sm:$0xff]
    %v217 = vld [vmem:[#allocation5 + $0x290] sm:$0xff]
    %v218 = vld [vmem:[#allocation5 + $0x298] sm:$0xff]
    %v219 = vld [vmem:[#allocation5 + $0x2a0] sm:$0xff]
    %v220 = vld [vmem:[#allocation5 + $0x2a8] sm:$0xff]
    %v221 = vld [vmem:[#allocation5 + $0x2b0] sm:$0xff]
    %v222 = vld [vmem:[#allocation5 + $0x2b8] sm:$0xff]
    %v223 = vld [vmem:[#allocation5 + $0x2c0] sm:$0xff]
    %v224 = vld [vmem:[#allocation5 + $0x2c8] sm:$0xff]
    %v225 = vld [vmem:[#allocation5 + $0x2d0] sm:$0xff]
    %v226 = vld [vmem:[#allocation5 + $0x2d8] sm:$0xff]
    %v227 = vld [vmem:[#allocation5 + $0x2e0] sm:$0xff]
    %v228 = vld [vmem:[#allocation5 + $0x2e8] sm:$0xff]
    %v229 = vld [vmem:[#allocation5 + $0x2f0] sm:$0xff]
    %v230 = vld [vmem:[#allocation5 + $0x2f8] sm:$0xff]
    %v231 = vld [vmem:[#allocation5 + $0x300] sm:$0xff]
    %v232 = vld [vmem:[#allocation5 + $0x308] sm:$0xff]
    %v331 = vunpack.c.l.b16 %v135
    %v332 = vunpack.c.h.b16 %v135
    %v333 = vunpack.c.l.b16 %v136
    %v334 = vunpack.c.h.b16 %v136
    %v335 = vunpack.c.l.b16 %v137
    %v336 = vunpack.c.h.b16 %v137
    %v337 = vunpack.c.l.b16 %v138
    %v338 = vunpack.c.h.b16 %v138
    %v339 = vunpack.c.l.b16 %v139
    %v340 = vunpack.c.h.b16 %v139
    %v341 = vunpack.c.l.b16 %v140
    %v342 = vunpack.c.h.b16 %v140
    %v343 = vunpack.c.l.b16 %v141
    %v344 = vunpack.c.h.b16 %v141
    %v345 = vunpack.c.l.b16 %v142
    %v346 = vunpack.c.h.b16 %v142
    %v347 = vunpack.c.l.b16 %v143
    %v348 = vunpack.c.h.b16 %v143
    %v349 = vunpack.c.l.b16 %v144
    %v350 = vunpack.c.h.b16 %v144
    %v351 = vunpack.c.l.b16 %v145
    %v352 = vunpack.c.h.b16 %v145
    %v353 = vunpack.c.l.b16 %v146
    %v354 = vunpack.c.h.b16 %v146
    %v355 = vunpack.c.l.b16 %v147
    %v356 = vunpack.c.h.b16 %v147
    %v357 = vunpack.c.l.b16 %v148
    %v358 = vunpack.c.h.b16 %v148
    %v359 = vunpack.c.l.b16 %v149
    %v360 = vunpack.c.h.b16 %v149
    %v361 = vunpack.c.l.b16 %v150
    %v362 = vunpack.c.h.b16 %v150
    %v363 = vunpack.c.l.b16 %v151
    %v364 = vunpack.c.h.b16 %v151
    %v365 = vunpack.c.l.b16 %v152
    %v366 = vunpack.c.h.b16 %v152
    %v367 = vunpack.c.l.b16 %v153
    %v368 = vunpack.c.h.b16 %v153
    %v369 = vunpack.c.l.b16 %v154
    %v370 = vunpack.c.h.b16 %v154
    %v371 = vunpack.c.l.b16 %v155
    %v372 = vunpack.c.h.b16 %v155
    %v373 = vunpack.c.l.b16 %v156
    %v374 = vunpack.c.h.b16 %v156
    %v375 = vunpack.c.l.b16 %v157
    %v376 = vunpack.c.h.b16 %v157
    %v377 = vunpack.c.l.b16 %v158
    %v378 = vunpack.c.h.b16 %v158
    %v379 = vunpack.c.l.b16 %v159
    %v380 = vunpack.c.h.b16 %v159
    %v381 = vunpack.c.l.b16 %v160
    %v382 = vunpack.c.h.b16 %v160
    %v383 = vunpack.c.l.b16 %v161
    %v384 = vunpack.c.h.b16 %v161
    %v385 = vunpack.c.l.b16 %v162
    %v386 = vunpack.c.h.b16 %v162
    %v387 = vunpack.c.l.b16 %v163
    %v388 = vunpack.c.h.b16 %v163
    %v389 = vunpack.c.l.b16 %v164
    %v390 = vunpack.c.h.b16 %v164
    %v391 = vunpack.c.l.b16 %v165
    %v392 = vunpack.c.h.b16 %v165
    %v393 = vunpack.c.l.b16 %v166
    %v394 = vunpack.c.h.b16 %v166
    %v395 = vunpack.c.l.b16 %v167
    %v396 = vunpack.c.h.b16 %v167
    %v397 = vunpack.c.l.b16 %v168
    %v398 = vunpack.c.h.b16 %v168
    %v399 = vunpack.c.l.b16 %v169
    %v400 = vunpack.c.h.b16 %v169
    %v401 = vunpack.c.l.b16 %v170
    %v402 = vunpack.c.h.b16 %v170
    %v403 = vunpack.c.l.b16 %v171
    %v404 = vunpack.c.h.b16 %v171
    %v405 = vunpack.c.l.b16 %v172
    %v406 = vunpack.c.h.b16 %v172
    %v407 = vunpack.c.l.b16 %v173
    %v408 = vunpack.c.h.b16 %v173
    %v409 = vunpack.c.l.b16 %v174
    %v410 = vunpack.c.h.b16 %v174
    %v411 = vunpack.c.l.b16 %v175
    %v412 = vunpack.c.h.b16 %v175
    %v413 = vunpack.c.l.b16 %v176
    %v414 = vunpack.c.h.b16 %v176
    %v415 = vunpack.c.l.b16 %v177
    %v416 = vunpack.c.h.b16 %v177
    %v417 = vunpack.c.l.b16 %v178
    %v418 = vunpack.c.h.b16 %v178
    %v419 = vunpack.c.l.b16 %v179
    %v420 = vunpack.c.h.b16 %v179
    %v421 = vunpack.c.l.b16 %v180
    %v422 = vunpack.c.h.b16 %v180
    %v423 = vunpack.c.l.b16 %v181
    %v424 = vunpack.c.h.b16 %v181
    %v425 = vunpack.c.l.b16 %v182
    %v426 = vunpack.c.h.b16 %v182
    %v427 = vunpack.c.l.b16 %v183
    %v428 = vunpack.c.h.b16 %v183
    %v429 = vunpack.c.l.b16 %v184
    %v430 = vunpack.c.h.b16 %v184
    %v431 = vunpack.c.l.b16 %v185
    %v432 = vunpack.c.h.b16 %v185
    %v433 = vunpack.c.l.b16 %v186
    %v434 = vunpack.c.h.b16 %v186
    %v435 = vunpack.c.l.b16 %v187
    %v436 = vunpack.c.h.b16 %v187
    %v437 = vunpack.c.l.b16 %v188
    %v438 = vunpack.c.h.b16 %v188
    %v439 = vunpack.c.l.b16 %v189
    %v440 = vunpack.c.h.b16 %v189
    %v441 = vunpack.c.l.b16 %v190
    %v442 = vunpack.c.h.b16 %v190
    %v443 = vunpack.c.l.b16 %v191
    %v444 = vunpack.c.h.b16 %v191
    %v445 = vunpack.c.l.b16 %v192
    %v446 = vunpack.c.h.b16 %v192
    %v447 = vunpack.c.l.b16 %v193
    %v448 = vunpack.c.h.b16 %v193
    %v449 = vunpack.c.l.b16 %v194
    %v450 = vunpack.c.h.b16 %v194
    %v451 = vunpack.c.l.b16 %v195
    %v452 = vunpack.c.h.b16 %v195
    %v453 = vunpack.c.l.b16 %v196
    %v454 = vunpack.c.h.b16 %v196
    %v455 = vunpack.c.l.b16 %v197
    %v456 = vunpack.c.h.b16 %v197
    %v457 = vunpack.c.l.b16 %v198
    %v458 = vunpack.c.h.b16 %v198
    %v459 = vunpack.c.l.b16 %v199
    %v460 = vunpack.c.h.b16 %v199
    %v461 = vunpack.c.l.b16 %v200
    %v462 = vunpack.c.h.b16 %v200
    %v463 = vunpack.c.l.b16 %v201
    %v464 = vunpack.c.h.b16 %v201
    %v465 = vunpack.c.l.b16 %v202
    %v466 = vunpack.c.h.b16 %v202
    %v467 = vunpack.c.l.b16 %v203
    %v468 = vunpack.c.h.b16 %v203
    %v469 = vunpack.c.l.b16 %v204
    %v470 = vunpack.c.h.b16 %v204
    %v471 = vunpack.c.l.b16 %v205
    %v472 = vunpack.c.h.b16 %v205
    %v473 = vunpack.c.l.b16 %v206
    %v474 = vunpack.c.h.b16 %v206
    %v475 = vunpack.c.l.b16 %v207
    %v476 = vunpack.c.h.b16 %v207
    %v477 = vunpack.c.l.b16 %v208
    %v478 = vunpack.c.h.b16 %v208
    %v479 = vunpack.c.l.b16 %v209
    %v480 = vunpack.c.h.b16 %v209
    %v481 = vunpack.c.l.b16 %v210
    %v482 = vunpack.c.h.b16 %v210
    %v483 = vunpack.c.l.b16 %v211
    %v484 = vunpack.c.h.b16 %v211
    %v485 = vunpack.c.l.b16 %v212
    %v486 = vunpack.c.h.b16 %v212
    %v487 = vunpack.c.l.b16 %v213
    %v488 = vunpack.c.h.b16 %v213
    %v489 = vunpack.c.l.b16 %v214
    %v490 = vunpack.c.h.b16 %v214
    %v491 = vunpack.c.l.b16 %v215
    %v492 = vunpack.c.h.b16 %v215
    %v493 = vunpack.c.l.b16 %v216
    %v494 = vunpack.c.h.b16 %v216
    %v495 = vunpack.c.l.b16 %v217
    %v496 = vunpack.c.h.b16 %v217
    %v497 = vunpack.c.l.b16 %v218
    %v498 = vunpack.c.h.b16 %v218
    %v499 = vunpack.c.l.b16 %v219
    %v500 = vunpack.c.h.b16 %v219
    %v501 = vunpack.c.l.b16 %v220
    %v502 = vunpack.c.h.b16 %v220
    %v503 = vunpack.c.l.b16 %v221
    %v504 = vunpack.c.h.b16 %v221
    %v505 = vunpack.c.l.b16 %v222
    %v506 = vunpack.c.h.b16 %v222
    %v507 = vunpack.c.l.b16 %v223
    %v508 = vunpack.c.h.b16 %v223
    %v509 = vunpack.c.l.b16 %v224
    %v510 = vunpack.c.h.b16 %v224
    %v511 = vunpack.c.l.b16 %v225
    %v512 = vunpack.c.h.b16 %v225
    %v513 = vunpack.c.l.b16 %v226
    %v514 = vunpack.c.h.b16 %v226
    %v515 = vunpack.c.l.b16 %v227
    %v516 = vunpack.c.h.b16 %v227
    %v517 = vunpack.c.l.b16 %v228
    %v518 = vunpack.c.h.b16 %v228
    %v519 = vunpack.c.l.b16 %v229
    %v520 = vunpack.c.h.b16 %v229
    %v521 = vunpack.c.l.b16 %v230
    %v522 = vunpack.c.h.b16 %v230
    %v523 = vunpack.c.l.b16 %v231
    %v524 = vunpack.c.h.b16 %v231
    %v525 = vunpack.c.l.b16 %v232
    %v526 = vunpack.c.h.b16 %v232
    %v527 = vpack.c.b16 %v333, %v331
    %v528 = vpack.c.b16 %v334, %v332
    %v529 = vpack.c.b16 %v337, %v335
    %v530 = vpack.c.b16 %v338, %v336
    %v531 = vpack.c.b16 %v341, %v339
    %v532 = vpack.c.b16 %v342, %v340
    %v533 = vpack.c.b16 %v345, %v343
    %v534 = vpack.c.b16 %v346, %v344
    %v535 = vpack.c.b16 %v349, %v347
    %v536 = vpack.c.b16 %v350, %v348
    %v537 = vpack.c.b16 %v353, %v351
    %v538 = vpack.c.b16 %v354, %v352
    %v539 = vpack.c.b16 %v357, %v355
    %v540 = vpack.c.b16 %v358, %v356
    %v541 = vpack.c.b16 %v361, %v359
    %v542 = vpack.c.b16 %v362, %v360
    %v543 = vpack.c.b16 %v365, %v363
    %v544 = vpack.c.b16 %v366, %v364
    %v545 = vpack.c.b16 %v369, %v367
    %v546 = vpack.c.b16 %v370, %v368
    %v547 = vpack.c.b16 %v373, %v371
    %v548 = vpack.c.b16 %v374, %v372
    %v549 = vpack.c.b16 %v377, %v375
    %v550 = vpack.c.b16 %v378, %v376
    %v551 = vpack.c.b16 %v381, %v379
    %v552 = vpack.c.b16 %v382, %v380
    %v553 = vpack.c.b16 %v385, %v383
    %v554 = vpack.c.b16 %v386, %v384
    %v555 = vpack.c.b16 %v389, %v387
    %v556 = vpack.c.b16 %v390, %v388
    %v557 = vpack.c.b16 %v393, %v391
    %v558 = vpack.c.b16 %v394, %v392
    %v559 = vpack.c.b16 %v397, %v395
    %v560 = vpack.c.b16 %v398, %v396
    %v561 = vpack.c.b16 %v401, %v399
    %v562 = vpack.c.b16 %v402, %v400
    %v563 = vpack.c.b16 %v405, %v403
    %v564 = vpack.c.b16 %v406, %v404
    %v565 = vpack.c.b16 %v409, %v407
    %v566 = vpack.c.b16 %v410, %v408
    %v567 = vpack.c.b16 %v413, %v411
    %v568 = vpack.c.b16 %v414, %v412
    %v569 = vpack.c.b16 %v417, %v415
    %v570 = vpack.c.b16 %v418, %v416
    %v571 = vpack.c.b16 %v421, %v419
    %v572 = vpack.c.b16 %v422, %v420
    %v573 = vpack.c.b16 %v425, %v423
    %v574 = vpack.c.b16 %v426, %v424
    %v575 = vpack.c.b16 %v429, %v427
    %v576 = vpack.c.b16 %v430, %v428
    %v577 = vpack.c.b16 %v433, %v431
    %v578 = vpack.c.b16 %v434, %v432
    %v579 = vpack.c.b16 %v437, %v435
    %v580 = vpack.c.b16 %v438, %v436
    %v581 = vpack.c.b16 %v441, %v439
    %v582 = vpack.c.b16 %v442, %v440
    %v583 = vpack.c.b16 %v445, %v443
    %v584 = vpack.c.b16 %v446, %v444
    %v585 = vpack.c.b16 %v449, %v447
    %v586 = vpack.c.b16 %v450, %v448
    %v587 = vpack.c.b16 %v453, %v451
    %v588 = vpack.c.b16 %v454, %v452
    %v589 = vpack.c.b16 %v457, %v455
    %v590 = vpack.c.b16 %v458, %v456
    %v591 = vpack.c.b16 %v461, %v459
    %v592 = vpack.c.b16 %v462, %v460
    %v593 = vpack.c.b16 %v465, %v463
    %v594 = vpack.c.b16 %v466, %v464
    %v595 = vpack.c.b16 %v469, %v467
    %v596 = vpack.c.b16 %v470, %v468
    %v597 = vpack.c.b16 %v473, %v471
    %v598 = vpack.c.b16 %v474, %v472
    %v599 = vpack.c.b16 %v477, %v475
    %v600 = vpack.c.b16 %v478, %v476
    %v601 = vpack.c.b16 %v481, %v479
    %v602 = vpack.c.b16 %v482, %v480
    %v603 = vpack.c.b16 %v485, %v483
    %v604 = vpack.c.b16 %v486, %v484
    %v605 = vpack.c.b16 %v489, %v487
    %v606 = vpack.c.b16 %v490, %v488
    %v607 = vpack.c.b16 %v493, %v491
    %v608 = vpack.c.b16 %v494, %v492
    %v609 = vpack.c.b16 %v497, %v495
    %v610 = vpack.c.b16 %v498, %v496
    %v611 = vpack.c.b16 %v501, %v499
    %v612 = vpack.c.b16 %v502, %v500
    %v613 = vpack.c.b16 %v505, %v503
    %v614 = vpack.c.b16 %v506, %v504
    %v615 = vpack.c.b16 %v509, %v507
    %v616 = vpack.c.b16 %v510, %v508
    %v617 = vpack.c.b16 %v513, %v511
    %v618 = vpack.c.b16 %v514, %v512
    %v619 = vpack.c.b16 %v517, %v515
    %v620 = vpack.c.b16 %v518, %v516
    %v621 = vpack.c.b16 %v521, %v519
    %v622 = vpack.c.b16 %v522, %v520
    %v623 = vpack.c.b16 %v525, %v523
    %v624 = vpack.c.b16 %v526, %v524
    %vm723 = vcmask 130048
    %v725 = vsel %vm723, %v134, 0
    %727 = vmatprep.subr.bf16.mxu0 %v542
    %728 = vmatpush1.bf16.msra.mxu0 %v541
    %729 = vmatprep.subr.bf16.mxu0 %v540
    %730 = vmatpush1.bf16.msra.mxu0 %v539
    %731 = vmatprep.subr.bf16.mxu0 %v538
    %732 = vmatpush1.bf16.msra.mxu0 %v537
    %733 = vmatprep.subr.bf16.mxu0 %v536
    %734 = vmatpush1.bf16.msra.mxu0 %v535
    %735 = vmatprep.subr.bf16.mxu0 %v534
    %736 = vmatpush1.bf16.msra.mxu0 %v533
    %737 = vmatprep.subr.bf16.mxu0 %v532
    %738 = vmatpush1.bf16.msra.mxu0 %v531
    %739 = vmatprep.subr.bf16.mxu0 %v530
    %740 = vmatpush1.bf16.msra.mxu0 %v529
    %741 = vmatprep.subr.bf16.mxu0 %v528
    %742 = vmatpush1.bf16.msra.mxu0 %v527
    %743 = vmatprep.subr.bf16.mxu0 %v558
    %744 = vmatpush2.bf16.msra.mxu0 %v557
    %745 = vmatprep.subr.bf16.mxu0 %v556
    %746 = vmatpush2.bf16.msra.mxu0 %v555
    %747 = vmatprep.subr.bf16.mxu0 %v554
    %748 = vmatpush2.bf16.msra.mxu0 %v553
    %749 = vmatprep.subr.bf16.mxu0 %v552
    %750 = vmatpush2.bf16.msra.mxu0 %v551
    %751 = vmatprep.subr.bf16.mxu0 %v550
    %752 = vmatpush2.bf16.msra.mxu0 %v549
    %753 = vmatprep.subr.bf16.mxu0 %v548
    %754 = vmatpush2.bf16.msra.mxu0 %v547
    %755 = vmatprep.subr.bf16.mxu0 %v546
    %756 = vmatpush2.bf16.msra.mxu0 %v545
    %757 = vmatprep.subr.bf16.mxu0 %v544
    %758 = vmatpush2.bf16.msra.mxu0 %v543
    %759 = vmatprep.mubr.bf16.mxu0 %v129
    %760 = vmatmul.mubr.bf16.gmra.mxu0 %v128
    %v761 = vpop.f32.mrf.mxu0
    %v762 = vadd.f32 0.0, %v761
    %v763 = vpop.f32.mrf.mxu0
    %v764 = vadd.f32 0.0, %v763
    %v765 = vpop.f32.mrf.mxu0
    %v766 = vpop.f32.mrf.mxu0
    %767 = vdwg.mxu0
    %768 = vmatprep.subr.bf16.mxu0 %v574
    %769 = vmatpush1.bf16.msra.mxu0 %v573
    %770 = vmatprep.subr.bf16.mxu0 %v572
    %771 = vmatpush1.bf16.msra.mxu0 %v571
    %772 = vmatprep.subr.bf16.mxu0 %v570
    %773 = vmatpush1.bf16.msra.mxu0 %v569
    %774 = vmatprep.subr.bf16.mxu0 %v568
    %775 = vmatpush1.bf16.msra.mxu0 %v567
    %776 = vmatprep.subr.bf16.mxu0 %v566
    %777 = vmatpush1.bf16.msra.mxu0 %v565
    %778 = vmatprep.subr.bf16.mxu0 %v564
    %779 = vmatpush1.bf16.msra.mxu0 %v563
    %780 = vmatprep.subr.bf16.mxu0 %v562
    %781 = vmatpush1.bf16.msra.mxu0 %v561
    %782 = vmatprep.subr.bf16.mxu0 %v560
    %783 = vmatpush1.bf16.msra.mxu0 %v559
    %784 = vmatprep.subr.bf16.mxu0 %v590
    %785 = vmatpush2.bf16.msra.mxu0 %v589
    %786 = vmatprep.subr.bf16.mxu0 %v588
    %787 = vmatpush2.bf16.msra.mxu0 %v587
    %788 = vmatprep.subr.bf16.mxu0 %v586
    %789 = vmatpush2.bf16.msra.mxu0 %v585
    %790 = vmatprep.subr.bf16.mxu0 %v584
    %791 = vmatpush2.bf16.msra.mxu0 %v583
    %792 = vmatprep.subr.bf16.mxu0 %v582
    %793 = vmatpush2.bf16.msra.mxu0 %v581
    %794 = vmatprep.subr.bf16.mxu0 %v580
    %795 = vmatpush2.bf16.msra.mxu0 %v579
    %796 = vmatprep.subr.bf16.mxu0 %v578
    %797 = vmatpush2.bf16.msra.mxu0 %v577
    %798 = vmatprep.subr.bf16.mxu0 %v576
    %799 = vmatpush2.bf16.msra.mxu0 %v575
    %800 = vmatprep.mubr.bf16.mxu0 %v131
    %801 = vmatmul.mubr.bf16.gmra.mxu0 %v130
    %v802 = vpop.f32.mrf.mxu0
    %v803 = vadd.f32 %v762, %v802
    %v804 = vpop.f32.mrf.mxu0
    %v805 = vadd.f32 %v764, %v804
    %v806 = vpop.f32.mrf.mxu0
    %v807 = vpop.f32.mrf.mxu0
    %808 = vdwg.mxu0
    %809 = vmatprep.subr.bf16.mxu0 %v606
    %810 = vmatpush1.bf16.msra.mxu0 %v605
    %811 = vmatprep.subr.bf16.mxu0 %v604
    %812 = vmatpush1.bf16.msra.mxu0 %v603
    %813 = vmatprep.subr.bf16.mxu0 %v602
    %814 = vmatpush1.bf16.msra.mxu0 %v601
    %815 = vmatprep.subr.bf16.mxu0 %v600
    %816 = vmatpush1.bf16.msra.mxu0 %v599
    %817 = vmatprep.subr.bf16.mxu0 %v598
    %818 = vmatpush1.bf16.msra.mxu0 %v597
    %819 = vmatprep.subr.bf16.mxu0 %v596
    %820 = vmatpush1.bf16.msra.mxu0 %v595
    %821 = vmatprep.subr.bf16.mxu0 %v594
    %822 = vmatpush1.bf16.msra.mxu0 %v593
    %823 = vmatprep.subr.bf16.mxu0 %v592
    %824 = vmatpush1.bf16.msra.mxu0 %v591
    %825 = vmatprep.subr.bf16.mxu0 %v622
    %826 = vmatpush2.bf16.msra.mxu0 %v621
    %827 = vmatprep.subr.bf16.mxu0 %v620
    %828 = vmatpush2.bf16.msra.mxu0 %v619
    %829 = vmatprep.subr.bf16.mxu0 %v618
    %830 = vmatpush2.bf16.msra.mxu0 %v617
    %831 = vmatprep.subr.bf16.mxu0 %v616
    %832 = vmatpush2.bf16.msra.mxu0 %v615
    %833 = vmatprep.subr.bf16.mxu0 %v614
    %834 = vmatpush2.bf16.msra.mxu0 %v613
    %835 = vmatprep.subr.bf16.mxu0 %v612
    %836 = vmatpush2.bf16.msra.mxu0 %v611
    %837 = vmatprep.subr.bf16.mxu0 %v610
    %838 = vmatpush2.bf16.msra.mxu0 %v609
    %839 = vmatprep.subr.bf16.mxu0 %v608
    %840 = vmatpush2.bf16.msra.mxu0 %v607
    %841 = vmatprep.mubr.bf16.mxu0 %v133
    %842 = vmatmul.mubr.bf16.gmra.mxu0 %v132
    %v843 = vpop.f32.mrf.mxu0
    %v844 = vadd.f32 %v803, %v843
    %v845 = vpop.f32.mrf.mxu0
    %v846 = vadd.f32 %v805, %v845
    %v847 = vpop.f32.mrf.mxu0
    %v848 = vpop.f32.mrf.mxu0
    %849 = vdwg.mxu0
    %850 = vmatprep.subr.bf16.mxu0 0
    %851 = vmatpush1.bf16.msra.mxu0 0
    %852 = vmatprep.subr.bf16.mxu0 0
    %853 = vmatpush1.bf16.msra.mxu0 0
    %854 = vmatprep.subr.bf16.mxu0 0
    %855 = vmatpush1.bf16.msra.mxu0 0
    %856 = vmatprep.subr.bf16.mxu0 0
    %857 = vmatpush1.bf16.msra.mxu0 0
    %858 = vmatprep.subr.bf16.mxu0 0
    %859 = vmatpush1.bf16.msra.mxu0 0
    %860 = vmatprep.subr.bf16.mxu0 0
    %861 = vmatpush1.bf16.msra.mxu0 0
    %862 = vmatprep.subr.bf16.mxu0 0
    %863 = vmatpush1.bf16.msra.mxu0 0
    %864 = vmatprep.subr.bf16.mxu0 %v624
    %865 = vmatpush1.bf16.msra.mxu0 %v623
    %866 = vmatprep.subr.bf16.mxu0 0
    %867 = vmatpush2.bf16.msra.mxu0 0
    %868 = vmatprep.subr.bf16.mxu0 0
    %869 = vmatpush2.bf16.msra.mxu0 0
    %870 = vmatprep.subr.bf16.mxu0 0
    %871 = vmatpush2.bf16.msra.mxu0 0
    %872 = vmatprep.subr.bf16.mxu0 0
    %873 = vmatpush2.bf16.msra.mxu0 0
    %874 = vmatprep.subr.bf16.mxu0 0
    %875 = vmatpush2.bf16.msra.mxu0 0
    %876 = vmatprep.subr.bf16.mxu0 0
    %877 = vmatpush2.bf16.msra.mxu0 0
    %878 = vmatprep.subr.bf16.mxu0 0
    %879 = vmatpush2.bf16.msra.mxu0 0
    %880 = vmatprep.subr.bf16.mxu0 0
    %881 = vmatpush2.bf16.msra.mxu0 0
    %882 = vmatprep.mubr.bf16.mxu0 0
    %883 = vmatmul.mubr.bf16.gmra.mxu0 %v725
    %v884 = vpop.f32.mrf.mxu0
    %v885 = vadd.f32 %v844, %v884
    %v886 = vpop.f32.mrf.mxu0
    %v887 = vadd.f32 %v846, %v886
    %v888 = vpop.f32.mrf.mxu0
    %v889 = vpop.f32.mrf.mxu0
    %890 = vdwg.mxu0
    %v891 = vpack.c.bf16 %v885, %v885
    %v892 = vpack.c.bf16 %v887, %v887
    %v893 = vld [vmem:[#allocation7] sm:$0xff]
    %v894 = vld [vmem:[#allocation7 + $0x8] sm:$0xff]
    %v895 = vld [vmem:[#allocation7 + $0x10] sm:$0xff]
    %v896 = vld [vmem:[#allocation7 + $0x18] sm:$0xff]
    %v897 = vld [vmem:[#allocation7 + $0x20] sm:$0xff]
    %v898 = vld [vmem:[#allocation7 + $0x28] sm:$0xff]
    %v899 = vld [vmem:[#allocation7 + $0x30] sm:$0xff]
    %v900 = vld [vmem:[#allocation7 + $0x38] sm:$0xff]
    %v901 = vld [vmem:[#allocation7 + $0x40] sm:$0xff]
    %v902 = vld [vmem:[#allocation7 + $0x48] sm:$0xff]
    %v903 = vld [vmem:[#allocation7 + $0x50] sm:$0xff]
    %v904 = vld [vmem:[#allocation7 + $0x58] sm:$0xff]
    %v905 = vld [vmem:[#allocation7 + $0x60] sm:$0xff]
    %v906 = vld [vmem:[#allocation7 + $0x68] sm:$0xff]
    %v907 = vld [vmem:[#allocation7 + $0x70] sm:$0xff]
    %v908 = vld [vmem:[#allocation7 + $0x78] sm:$0xff]
    %v909 = vld [vmem:[#allocation7 + $0x80] sm:$0xff]
    %v910 = vld [vmem:[#allocation7 + $0x88] sm:$0xff]
    %v911 = vld [vmem:[#allocation7 + $0x90] sm:$0xff]
    %v912 = vld [vmem:[#allocation7 + $0x98] sm:$0xff]
    %v913 = vld [vmem:[#allocation7 + $0xa0] sm:$0xff]
    %v914 = vld [vmem:[#allocation7 + $0xa8] sm:$0xff]
    %v915 = vld [vmem:[#allocation7 + $0xb0] sm:$0xff]
    %v916 = vld [vmem:[#allocation7 + $0xb8] sm:$0xff]
    %v917 = vld [vmem:[#allocation7 + $0xc0] sm:$0xff]
    %v918 = vld [vmem:[#allocation7 + $0xc8] sm:$0xff]
    %v919 = vld [vmem:[#allocation7 + $0xd0] sm:$0xff]
    %v920 = vld [vmem:[#allocation7 + $0xd8] sm:$0xff]
    %v921 = vld [vmem:[#allocation7 + $0xe0] sm:$0xff]
    %v922 = vld [vmem:[#allocation7 + $0xe8] sm:$0xff]
    %v923 = vld [vmem:[#allocation7 + $0xf0] sm:$0xff]
    %v924 = vld [vmem:[#allocation7 + $0xf8] sm:$0xff]
    %v957 = vunpack.c.l.b16 %v893
    %v958 = vunpack.c.h.b16 %v893
    %v959 = vunpack.c.l.b16 %v894
    %v960 = vunpack.c.h.b16 %v894
    %v961 = vunpack.c.l.b16 %v895
    %v962 = vunpack.c.h.b16 %v895
    %v963 = vunpack.c.l.b16 %v896
    %v964 = vunpack.c.h.b16 %v896
    %v965 = vunpack.c.l.b16 %v897
    %v966 = vunpack.c.h.b16 %v897
    %v967 = vunpack.c.l.b16 %v898
    %v968 = vunpack.c.h.b16 %v898
    %v969 = vunpack.c.l.b16 %v899
    %v970 = vunpack.c.h.b16 %v899
    %v971 = vunpack.c.l.b16 %v900
    %v972 = vunpack.c.h.b16 %v900
    %v973 = vunpack.c.l.b16 %v901
    %v974 = vunpack.c.h.b16 %v901
    %v975 = vunpack.c.l.b16 %v902
    %v976 = vunpack.c.h.b16 %v902
    %v977 = vunpack.c.l.b16 %v903
    %v978 = vunpack.c.h.b16 %v903
    %v979 = vunpack.c.l.b16 %v904
    %v980 = vunpack.c.h.b16 %v904
    %v981 = vunpack.c.l.b16 %v905
    %v982 = vunpack.c.h.b16 %v905
    %v983 = vunpack.c.l.b16 %v906
    %v984 = vunpack.c.h.b16 %v906
    %v985 = vunpack.c.l.b16 %v907
    %v986 = vunpack.c.h.b16 %v907
    %v987 = vunpack.c.l.b16 %v908
    %v988 = vunpack.c.h.b16 %v908
    %v989 = vunpack.c.l.b16 %v909
    %v990 = vunpack.c.h.b16 %v909
    %v991 = vunpack.c.l.b16 %v910
    %v992 = vunpack.c.h.b16 %v910
    %v993 = vunpack.c.l.b16 %v911
    %v994 = vunpack.c.h.b16 %v911
    %v995 = vunpack.c.l.b16 %v912
    %v996 = vunpack.c.h.b16 %v912
    %v997 = vunpack.c.l.b16 %v913
    %v998 = vunpack.c.h.b16 %v913
    %v999 = vunpack.c.l.b16 %v914
    %v1000 = vunpack.c.h.b16 %v914
    %v1001 = vunpack.c.l.b16 %v915
    %v1002 = vunpack.c.h.b16 %v915
    %v1003 = vunpack.c.l.b16 %v916
    %v1004 = vunpack.c.h.b16 %v916
    %v1005 = vunpack.c.l.b16 %v917
    %v1006 = vunpack.c.h.b16 %v917
    %v1007 = vunpack.c.l.b16 %v918
    %v1008 = vunpack.c.h.b16 %v918
    %v1009 = vunpack.c.l.b16 %v919
    %v1010 = vunpack.c.h.b16 %v919
    %v1011 = vunpack.c.l.b16 %v920
    %v1012 = vunpack.c.h.b16 %v920
    %v1013 = vunpack.c.l.b16 %v921
    %v1014 = vunpack.c.h.b16 %v921
    %v1015 = vunpack.c.l.b16 %v922
    %v1016 = vunpack.c.h.b16 %v922
    %v1017 = vunpack.c.l.b16 %v923
    %v1018 = vunpack.c.h.b16 %v923
    %v1019 = vunpack.c.l.b16 %v924
    %v1020 = vunpack.c.h.b16 %v924
    %v1021 = vpack.c.b16 %v959, %v957
    %v1022 = vpack.c.b16 %v960, %v958
    %v1023 = vpack.c.b16 %v963, %v961
    %v1024 = vpack.c.b16 %v964, %v962
    %v1025 = vpack.c.b16 %v967, %v965
    %v1026 = vpack.c.b16 %v968, %v966
    %v1027 = vpack.c.b16 %v971, %v969
    %v1028 = vpack.c.b16 %v972, %v970
    %v1029 = vpack.c.b16 %v975, %v973
    %v1030 = vpack.c.b16 %v976, %v974
    %v1031 = vpack.c.b16 %v979, %v977
    %v1032 = vpack.c.b16 %v980, %v978
    %v1033 = vpack.c.b16 %v983, %v981
    %v1034 = vpack.c.b16 %v984, %v982
    %v1035 = vpack.c.b16 %v987, %v985
    %v1036 = vpack.c.b16 %v988, %v986
    %v1037 = vpack.c.b16 %v991, %v989
    %v1038 = vpack.c.b16 %v992, %v990
    %v1039 = vpack.c.b16 %v995, %v993
    %v1040 = vpack.c.b16 %v996, %v994
    %v1041 = vpack.c.b16 %v999, %v997
    %v1042 = vpack.c.b16 %v1000, %v998
    %v1043 = vpack.c.b16 %v1003, %v1001
    %v1044 = vpack.c.b16 %v1004, %v1002
    %v1045 = vpack.c.b16 %v1007, %v1005
    %v1046 = vpack.c.b16 %v1008, %v1006
    %v1047 = vpack.c.b16 %v1011, %v1009
    %v1048 = vpack.c.b16 %v1012, %v1010
    %v1049 = vpack.c.b16 %v1015, %v1013
    %v1050 = vpack.c.b16 %v1016, %v1014
    %v1051 = vpack.c.b16 %v1019, %v1017
    %v1052 = vpack.c.b16 %v1020, %v1018
    %1085 = vmatprep.subr.bf16.mxu0 %v1036
    %1086 = vmatpush1.bf16.msra.mxu0 %v1035
    %1087 = vmatprep.subr.bf16.mxu0 %v1034
    %1088 = vmatpush1.bf16.msra.mxu0 %v1033
    %1089 = vmatprep.subr.bf16.mxu0 %v1032
    %1090 = vmatpush1.bf16.msra.mxu0 %v1031
    %1091 = vmatprep.subr.bf16.mxu0 %v1030
    %1092 = vmatpush1.bf16.msra.mxu0 %v1029
    %1093 = vmatprep.subr.bf16.mxu0 %v1028
    %1094 = vmatpush1.bf16.msra.mxu0 %v1027
    %1095 = vmatprep.subr.bf16.mxu0 %v1026
    %1096 = vmatpush1.bf16.msra.mxu0 %v1025
    %1097 = vmatprep.subr.bf16.mxu0 %v1024
    %1098 = vmatpush1.bf16.msra.mxu0 %v1023
    %1099 = vmatprep.subr.bf16.mxu0 %v1022
    %1100 = vmatpush1.bf16.msra.mxu0 %v1021
    %1101 = vmatprep.subr.bf16.mxu0 %v1052
    %1102 = vmatpush2.bf16.msra.mxu0 %v1051
    %1103 = vmatprep.subr.bf16.mxu0 %v1050
    %1104 = vmatpush2.bf16.msra.mxu0 %v1049
    %1105 = vmatprep.subr.bf16.mxu0 %v1048
    %1106 = vmatpush2.bf16.msra.mxu0 %v1047
    %1107 = vmatprep.subr.bf16.mxu0 %v1046
    %1108 = vmatpush2.bf16.msra.mxu0 %v1045
    %1109 = vmatprep.subr.bf16.mxu0 %v1044
    %1110 = vmatpush2.bf16.msra.mxu0 %v1043
    %1111 = vmatprep.subr.bf16.mxu0 %v1042
    %1112 = vmatpush2.bf16.msra.mxu0 %v1041
    %1113 = vmatprep.subr.bf16.mxu0 %v1040
    %1114 = vmatpush2.bf16.msra.mxu0 %v1039
    %1115 = vmatprep.subr.bf16.mxu0 %v1038
    %1116 = vmatpush2.bf16.msra.mxu0 %v1037
    %1117 = vmatprep.mubr.bf16.mxu0 %v892
    %1118 = vmatmul.mubr.bf16.gmra.mxu0 %v891
    %v1119 = vpop.f32.mrf.mxu0
    %v1120 = vadd.f32 0.0, %v1119
    %v1121 = vpop.f32.mrf.mxu0
    %v1122 = vadd.f32 0.0, %v1121
    %v1123 = vpop.f32.mrf.mxu0
    %v1124 = vpop.f32.mrf.mxu0
    %1125 = vdwg.mxu0
    %v1126 = vmul.f32 %v1120, %v885
    %v1127 = vmul.f32 %v1122, %v887
    %v1128 = vadd.f32 %v1126, %v885
    %v1129 = vadd.f32 %v1127, %v887
    %v1130 = vpack.c.bf16 %v1128, %v1128
    %v1131 = vpack.c.bf16 %v1129, %v1129
    %v1132 = vld [vmem:[#allocation8] sm:$0xff]
    %v1133 = vld [vmem:[#allocation8 + $0x8] sm:$0xff]
    %v1134 = vld [vmem:[#allocation8 + $0x10] sm:$0xff]
    %v1135 = vld [vmem:[#allocation8 + $0x18] sm:$0xff]
    %v1136 = vld [vmem:[#allocation8 + $0x20] sm:$0xff]
    %v1137 = vld [vmem:[#allocation8 + $0x28] sm:$0xff]
    %v1138 = vld [vmem:[#allocation8 + $0x30] sm:$0xff]
    %v1139 = vld [vmem:[#allocation8 + $0x38] sm:$0xff]
    %v1140 = vld [vmem:[#allocation8 + $0x40] sm:$0xff]
    %v1141 = vld [vmem:[#allocation8 + $0x48] sm:$0xff]
    %v1142 = vld [vmem:[#allocation8 + $0x50] sm:$0xff]
    %v1143 = vld [vmem:[#allocation8 + $0x58] sm:$0xff]
    %v1144 = vld [vmem:[#allocation8 + $0x60] sm:$0xff]
    %v1145 = vld [vmem:[#allocation8 + $0x68] sm:$0xff]
    %v1146 = vld [vmem:[#allocation8 + $0x70] sm:$0xff]
    %v1147 = vld [vmem:[#allocation8 + $0x78] sm:$0xff]
    %v1148 = vld [vmem:[#allocation8 + $0x80] sm:$0xff]
    %v1149 = vld [vmem:[#allocation8 + $0x88] sm:$0xff]
    %v1150 = vld [vmem:[#allocation8 + $0x90] sm:$0xff]
    %v1151 = vld [vmem:[#allocation8 + $0x98] sm:$0xff]
    %v1152 = vld [vmem:[#allocation8 + $0xa0] sm:$0xff]
    %v1153 = vld [vmem:[#allocation8 + $0xa8] sm:$0xff]
    %v1154 = vld [vmem:[#allocation8 + $0xb0] sm:$0xff]
    %v1155 = vld [vmem:[#allocation8 + $0xb8] sm:$0xff]
    %v1156 = vld [vmem:[#allocation8 + $0xc0] sm:$0xff]
    %v1157 = vld [vmem:[#allocation8 + $0xc8] sm:$0xff]
    %v1158 = vld [vmem:[#allocation8 + $0xd0] sm:$0xff]
    %v1159 = vld [vmem:[#allocation8 + $0xd8] sm:$0xff]
    %v1160 = vld [vmem:[#allocation8 + $0xe0] sm:$0xff]
    %v1161 = vld [vmem:[#allocation8 + $0xe8] sm:$0xff]
    %v1162 = vld [vmem:[#allocation8 + $0xf0] sm:$0xff]
    %v1163 = vld [vmem:[#allocation8 + $0xf8] sm:$0xff]
    %v1196 = vunpack.c.l.b16 %v1132
    %v1197 = vunpack.c.h.b16 %v1132
    %v1198 = vunpack.c.l.b16 %v1133
    %v1199 = vunpack.c.h.b16 %v1133
    %v1200 = vunpack.c.l.b16 %v1134
    %v1201 = vunpack.c.h.b16 %v1134
    %v1202 = vunpack.c.l.b16 %v1135
    %v1203 = vunpack.c.h.b16 %v1135
    %v1204 = vunpack.c.l.b16 %v1136
    %v1205 = vunpack.c.h.b16 %v1136
    %v1206 = vunpack.c.l.b16 %v1137
    %v1207 = vunpack.c.h.b16 %v1137
    %v1208 = vunpack.c.l.b16 %v1138
    %v1209 = vunpack.c.h.b16 %v1138
    %v1210 = vunpack.c.l.b16 %v1139
    %v1211 = vunpack.c.h.b16 %v1139
    %v1212 = vunpack.c.l.b16 %v1140
    %v1213 = vunpack.c.h.b16 %v1140
    %v1214 = vunpack.c.l.b16 %v1141
    %v1215 = vunpack.c.h.b16 %v1141
    %v1216 = vunpack.c.l.b16 %v1142
    %v1217 = vunpack.c.h.b16 %v1142
    %v1218 = vunpack.c.l.b16 %v1143
    %v1219 = vunpack.c.h.b16 %v1143
    %v1220 = vunpack.c.l.b16 %v1144
    %v1221 = vunpack.c.h.b16 %v1144
    %v1222 = vunpack.c.l.b16 %v1145
    %v1223 = vunpack.c.h.b16 %v1145
    %v1224 = vunpack.c.l.b16 %v1146
    %v1225 = vunpack.c.h.b16 %v1146
    %v1226 = vunpack.c.l.b16 %v1147
    %v1227 = vunpack.c.h.b16 %v1147
    %v1228 = vunpack.c.l.b16 %v1148
    %v1229 = vunpack.c.h.b16 %v1148
    %v1230 = vunpack.c.l.b16 %v1149
    %v1231 = vunpack.c.h.b16 %v1149
    %v1232 = vunpack.c.l.b16 %v1150
    %v1233 = vunpack.c.h.b16 %v1150
    %v1234 = vunpack.c.l.b16 %v1151
    %v1235 = vunpack.c.h.b16 %v1151
    %v1236 = vunpack.c.l.b16 %v1152
    %v1237 = vunpack.c.h.b16 %v1152
    %v1238 = vunpack.c.l.b16 %v1153
    %v1239 = vunpack.c.h.b16 %v1153
    %v1240 = vunpack.c.l.b16 %v1154
    %v1241 = vunpack.c.h.b16 %v1154
    %v1242 = vunpack.c.l.b16 %v1155
    %v1243 = vunpack.c.h.b16 %v1155
    %v1244 = vunpack.c.l.b16 %v1156
    %v1245 = vunpack.c.h.b16 %v1156
    %v1246 = vunpack.c.l.b16 %v1157
    %v1247 = vunpack.c.h.b16 %v1157
    %v1248 = vunpack.c.l.b16 %v1158
    %v1249 = vunpack.c.h.b16 %v1158
    %v1250 = vunpack.c.l.b16 %v1159
    %v1251 = vunpack.c.h.b16 %v1159
    %v1252 = vunpack.c.l.b16 %v1160
    %v1253 = vunpack.c.h.b16 %v1160
    %v1254 = vunpack.c.l.b16 %v1161
    %v1255 = vunpack.c.h.b16 %v1161
    %v1256 = vunpack.c.l.b16 %v1162
    %v1257 = vunpack.c.h.b16 %v1162
    %v1258 = vunpack.c.l.b16 %v1163
    %v1259 = vunpack.c.h.b16 %v1163
    %v1260 = vpack.c.b16 %v1198, %v1196
    %v1261 = vpack.c.b16 %v1199, %v1197
    %v1262 = vpack.c.b16 %v1202, %v1200
    %v1263 = vpack.c.b16 %v1203, %v1201
    %v1264 = vpack.c.b16 %v1206, %v1204
    %v1265 = vpack.c.b16 %v1207, %v1205
    %v1266 = vpack.c.b16 %v1210, %v1208
    %v1267 = vpack.c.b16 %v1211, %v1209
    %v1268 = vpack.c.b16 %v1214, %v1212
    %v1269 = vpack.c.b16 %v1215, %v1213
    %v1270 = vpack.c.b16 %v1218, %v1216
    %v1271 = vpack.c.b16 %v1219, %v1217
    %v1272 = vpack.c.b16 %v1222, %v1220
    %v1273 = vpack.c.b16 %v1223, %v1221
    %v1274 = vpack.c.b16 %v1226, %v1224
    %v1275 = vpack.c.b16 %v1227, %v1225
    %v1276 = vpack.c.b16 %v1230, %v1228
    %v1277 = vpack.c.b16 %v1231, %v1229
    %v1278 = vpack.c.b16 %v1234, %v1232
    %v1279 = vpack.c.b16 %v1235, %v1233
    %v1280 = vpack.c.b16 %v1238, %v1236
    %v1281 = vpack.c.b16 %v1239, %v1237
    %v1282 = vpack.c.b16 %v1242, %v1240
    %v1283 = vpack.c.b16 %v1243, %v1241
    %v1284 = vpack.c.b16 %v1246, %v1244
    %v1285 = vpack.c.b16 %v1247, %v1245
    %v1286 = vpack.c.b16 %v1250, %v1248
    %v1287 = vpack.c.b16 %v1251, %v1249
    %v1288 = vpack.c.b16 %v1254, %v1252
    %v1289 = vpack.c.b16 %v1255, %v1253
    %v1290 = vpack.c.b16 %v1258, %v1256
    %v1291 = vpack.c.b16 %v1259, %v1257
    %1324 = vmatprep.subr.bf16.mxu0 %v1275
    %1325 = vmatpush1.bf16.msra.mxu0 %v1274
    %1326 = vmatprep.subr.bf16.mxu0 %v1273
    %1327 = vmatpush1.bf16.msra.mxu0 %v1272
    %1328 = vmatprep.subr.bf16.mxu0 %v1271
    %1329 = vmatpush1.bf16.msra.mxu0 %v1270
    %1330 = vmatprep.subr.bf16.mxu0 %v1269
    %1331 = vmatpush1.bf16.msra.mxu0 %v1268
    %1332 = vmatprep.subr.bf16.mxu0 %v1267
    %1333 = vmatpush1.bf16.msra.mxu0 %v1266
    %1334 = vmatprep.subr.bf16.mxu0 %v1265
    %1335 = vmatpush1.bf16.msra.mxu0 %v1264
    %1336 = vmatprep.subr.bf16.mxu0 %v1263
    %1337 = vmatpush1.bf16.msra.mxu0 %v1262
    %1338 = vmatprep.subr.bf16.mxu0 %v1261
    %1339 = vmatpush1.bf16.msra.mxu0 %v1260
    %1340 = vmatprep.subr.bf16.mxu0 %v1291
    %1341 = vmatpush2.bf16.msra.mxu0 %v1290
    %1342 = vmatprep.subr.bf16.mxu0 %v1289
    %1343 = vmatpush2.bf16.msra.mxu0 %v1288
    %1344 = vmatprep.subr.bf16.mxu0 %v1287
    %1345 = vmatpush2.bf16.msra.mxu0 %v1286
    %1346 = vmatprep.subr.bf16.mxu0 %v1285
    %1347 = vmatpush2.bf16.msra.mxu0 %v1284
    %1348 = vmatprep.subr.bf16.mxu0 %v1283
    %1349 = vmatpush2.bf16.msra.mxu0 %v1282
    %1350 = vmatprep.subr.bf16.mxu0 %v1281
    %1351 = vmatpush2.bf16.msra.mxu0 %v1280
    %1352 = vmatprep.subr.bf16.mxu0 %v1279
    %1353 = vmatpush2.bf16.msra.mxu0 %v1278
    %1354 = vmatprep.subr.bf16.mxu0 %v1277
    %1355 = vmatpush2.bf16.msra.mxu0 %v1276
    %1356 = vmatprep.mubr.bf16.mxu0 %v1131
    %1357 = vmatmul.mubr.bf16.gmra.mxu0 %v1130
    %v1358 = vpop.f32.mrf.mxu0
    %v1359 = vadd.f32 0.0, %v1358
    %v1360 = vpop.f32.mrf.mxu0
    %v1361 = vadd.f32 0.0, %v1360
    %v1362 = vpop.f32.mrf.mxu0
    %v1363 = vpop.f32.mrf.mxu0
    %1364 = vdwg.mxu0
    %v1365 = vmul.f32 %v1359, %v885
    %v1366 = vmul.f32 %v1361, %v887
    %v1367 = vadd.f32 %v1365, %v885
    %v1368 = vadd.f32 %v1366, %v887
    %v1369 = vpack.c.bf16 %v1367, %v1367
    %v1370 = vpack.c.bf16 %v1368, %v1368
    %v1371 = vld [vmem:[#allocation10] sm:$0xff]
    %v1372 = vld [vmem:[#allocation10 + $0x8] sm:$0xff]
    %v1373 = vld [vmem:[#allocation10 + $0x10] sm:$0xff]
    %v1374 = vld [vmem:[#allocation10 + $0x18] sm:$0xff]
    %v1375 = vld [vmem:[#allocation10 + $0x20] sm:$0xff]
    %v1376 = vld [vmem:[#allocation10 + $0x28] sm:$0xff]
    %v1377 = vld [vmem:[#allocation10 + $0x30] sm:$0xff]
    %v1378 = vld [vmem:[#allocation10 + $0x38] sm:$0xff]
    %v1379 = vld [vmem:[#allocation10 + $0x40] sm:$0xff]
    %v1380 = vld [vmem:[#allocation10 + $0x48] sm:$0xff]
    %v1381 = vld [vmem:[#allocation10 + $0x50] sm:$0xff]
    %v1382 = vld [vmem:[#allocation10 + $0x58] sm:$0xff]
    %v1383 = vld [vmem:[#allocation10 + $0x60] sm:$0xff]
    %v1384 = vld [vmem:[#allocation10 + $0x68] sm:$0xff]
    %v1385 = vld [vmem:[#allocation10 + $0x70] sm:$0xff]
    %v1386 = vld [vmem:[#allocation10 + $0x78] sm:$0xff]
    %v1387 = vld [vmem:[#allocation10 + $0x80] sm:$0xff]
    %v1388 = vld [vmem:[#allocation10 + $0x88] sm:$0xff]
    %v1389 = vld [vmem:[#allocation10 + $0x90] sm:$0xff]
    %v1390 = vld [vmem:[#allocation10 + $0x98] sm:$0xff]
    %v1391 = vld [vmem:[#allocation10 + $0xa0] sm:$0xff]
    %v1392 = vld [vmem:[#allocation10 + $0xa8] sm:$0xff]
    %v1393 = vld [vmem:[#allocation10 + $0xb0] sm:$0xff]
    %v1394 = vld [vmem:[#allocation10 + $0xb8] sm:$0xff]
    %v1395 = vld [vmem:[#allocation10 + $0xc0] sm:$0xff]
    %v1396 = vld [vmem:[#allocation10 + $0xc8] sm:$0xff]
    %v1397 = vld [vmem:[#allocation10 + $0xd0] sm:$0xff]
    %v1398 = vld [vmem:[#allocation10 + $0xd8] sm:$0xff]
    %v1399 = vld [vmem:[#allocation10 + $0xe0] sm:$0xff]
    %v1400 = vld [vmem:[#allocation10 + $0xe8] sm:$0xff]
    %v1401 = vld [vmem:[#allocation10 + $0xf0] sm:$0xff]
    %v1402 = vld [vmem:[#allocation10 + $0xf8] sm:$0xff]
    %v1435 = vunpack.c.l.b16 %v1371
    %v1436 = vunpack.c.h.b16 %v1371
    %v1437 = vunpack.c.l.b16 %v1372
    %v1438 = vunpack.c.h.b16 %v1372
    %v1439 = vunpack.c.l.b16 %v1373
    %v1440 = vunpack.c.h.b16 %v1373
    %v1441 = vunpack.c.l.b16 %v1374
    %v1442 = vunpack.c.h.b16 %v1374
    %v1443 = vunpack.c.l.b16 %v1375
    %v1444 = vunpack.c.h.b16 %v1375
    %v1445 = vunpack.c.l.b16 %v1376
    %v1446 = vunpack.c.h.b16 %v1376
    %v1447 = vunpack.c.l.b16 %v1377
    %v1448 = vunpack.c.h.b16 %v1377
    %v1449 = vunpack.c.l.b16 %v1378
    %v1450 = vunpack.c.h.b16 %v1378
    %v1451 = vunpack.c.l.b16 %v1379
    %v1452 = vunpack.c.h.b16 %v1379
    %v1453 = vunpack.c.l.b16 %v1380
    %v1454 = vunpack.c.h.b16 %v1380
    %v1455 = vunpack.c.l.b16 %v1381
    %v1456 = vunpack.c.h.b16 %v1381
    %v1457 = vunpack.c.l.b16 %v1382
    %v1458 = vunpack.c.h.b16 %v1382
    %v1459 = vunpack.c.l.b16 %v1383
    %v1460 = vunpack.c.h.b16 %v1383
    %v1461 = vunpack.c.l.b16 %v1384
    %v1462 = vunpack.c.h.b16 %v1384
    %v1463 = vunpack.c.l.b16 %v1385
    %v1464 = vunpack.c.h.b16 %v1385
    %v1465 = vunpack.c.l.b16 %v1386
    %v1466 = vunpack.c.h.b16 %v1386
    %v1467 = vunpack.c.l.b16 %v1387
    %v1468 = vunpack.c.h.b16 %v1387
    %v1469 = vunpack.c.l.b16 %v1388
    %v1470 = vunpack.c.h.b16 %v1388
    %v1471 = vunpack.c.l.b16 %v1389
    %v1472 = vunpack.c.h.b16 %v1389
    %v1473 = vunpack.c.l.b16 %v1390
    %v1474 = vunpack.c.h.b16 %v1390
    %v1475 = vunpack.c.l.b16 %v1391
    %v1476 = vunpack.c.h.b16 %v1391
    %v1477 = vunpack.c.l.b16 %v1392
    %v1478 = vunpack.c.h.b16 %v1392
    %v1479 = vunpack.c.l.b16 %v1393
    %v1480 = vunpack.c.h.b16 %v1393
    %v1481 = vunpack.c.l.b16 %v1394
    %v1482 = vunpack.c.h.b16 %v1394
    %v1483 = vunpack.c.l.b16 %v1395
    %v1484 = vunpack.c.h.b16 %v1395
    %v1485 = vunpack.c.l.b16 %v1396
    %v1486 = vunpack.c.h.b16 %v1396
    %v1487 = vunpack.c.l.b16 %v1397
    %v1488 = vunpack.c.h.b16 %v1397
    %v1489 = vunpack.c.l.b16 %v1398
    %v1490 = vunpack.c.h.b16 %v1398
    %v1491 = vunpack.c.l.b16 %v1399
    %v1492 = vunpack.c.h.b16 %v1399
    %v1493 = vunpack.c.l.b16 %v1400
    %v1494 = vunpack.c.h.b16 %v1400
    %v1495 = vunpack.c.l.b16 %v1401
    %v1496 = vunpack.c.h.b16 %v1401
    %v1497 = vunpack.c.l.b16 %v1402
    %v1498 = vunpack.c.h.b16 %v1402
    %v1499 = vpack.c.b16 %v1437, %v1435
    %v1500 = vpack.c.b16 %v1438, %v1436
    %v1501 = vpack.c.b16 %v1441, %v1439
    %v1502 = vpack.c.b16 %v1442, %v1440
    %v1503 = vpack.c.b16 %v1445, %v1443
    %v1504 = vpack.c.b16 %v1446, %v1444
    %v1505 = vpack.c.b16 %v1449, %v1447
    %v1506 = vpack.c.b16 %v1450, %v1448
    %v1507 = vpack.c.b16 %v1453, %v1451
    %v1508 = vpack.c.b16 %v1454, %v1452
    %v1509 = vpack.c.b16 %v1457, %v1455
    %v1510 = vpack.c.b16 %v1458, %v1456
    %v1511 = vpack.c.b16 %v1461, %v1459
    %v1512 = vpack.c.b16 %v1462, %v1460
    %v1513 = vpack.c.b16 %v1465, %v1463
    %v1514 = vpack.c.b16 %v1466, %v1464
    %v1515 = vpack.c.b16 %v1469, %v1467
    %v1516 = vpack.c.b16 %v1470, %v1468
    %v1517 = vpack.c.b16 %v1473, %v1471
    %v1518 = vpack.c.b16 %v1474, %v1472
    %v1519 = vpack.c.b16 %v1477, %v1475
    %v1520 = vpack.c.b16 %v1478, %v1476
    %v1521 = vpack.c.b16 %v1481, %v1479
    %v1522 = vpack.c.b16 %v1482, %v1480
    %v1523 = vpack.c.b16 %v1485, %v1483
    %v1524 = vpack.c.b16 %v1486, %v1484
    %v1525 = vpack.c.b16 %v1489, %v1487
    %v1526 = vpack.c.b16 %v1490, %v1488
    %v1527 = vpack.c.b16 %v1493, %v1491
    %v1528 = vpack.c.b16 %v1494, %v1492
    %v1529 = vpack.c.b16 %v1497, %v1495
    %v1530 = vpack.c.b16 %v1498, %v1496
    %1563 = vmatprep.subr.bf16.mxu0 %v1514
    %1564 = vmatpush1.bf16.msra.mxu0 %v1513
    %1565 = vmatprep.subr.bf16.mxu0 %v1512
    %1566 = vmatpush1.bf16.msra.mxu0 %v1511
    %1567 = vmatprep.subr.bf16.mxu0 %v1510
    %1568 = vmatpush1.bf16.msra.mxu0 %v1509
    %1569 = vmatprep.subr.bf16.mxu0 %v1508
    %1570 = vmatpush1.bf16.msra.mxu0 %v1507
    %1571 = vmatprep.subr.bf16.mxu0 %v1506
    %1572 = vmatpush1.bf16.msra.mxu0 %v1505
    %1573 = vmatprep.subr.bf16.mxu0 %v1504
    %1574 = vmatpush1.bf16.msra.mxu0 %v1503
    %1575 = vmatprep.subr.bf16.mxu0 %v1502
    %1576 = vmatpush1.bf16.msra.mxu0 %v1501
    %1577 = vmatprep.subr.bf16.mxu0 %v1500
    %1578 = vmatpush1.bf16.msra.mxu0 %v1499
    %1579 = vmatprep.subr.bf16.mxu0 %v1530
    %1580 = vmatpush2.bf16.msra.mxu0 %v1529
    %1581 = vmatprep.subr.bf16.mxu0 %v1528
    %1582 = vmatpush2.bf16.msra.mxu0 %v1527
    %1583 = vmatprep.subr.bf16.mxu0 %v1526
    %1584 = vmatpush2.bf16.msra.mxu0 %v1525
    %1585 = vmatprep.subr.bf16.mxu0 %v1524
    %1586 = vmatpush2.bf16.msra.mxu0 %v1523
    %1587 = vmatprep.subr.bf16.mxu0 %v1522
    %1588 = vmatpush2.bf16.msra.mxu0 %v1521
    %1589 = vmatprep.subr.bf16.mxu0 %v1520
    %1590 = vmatpush2.bf16.msra.mxu0 %v1519
    %1591 = vmatprep.subr.bf16.mxu0 %v1518
    %1592 = vmatpush2.bf16.msra.mxu0 %v1517
    %1593 = vmatprep.subr.bf16.mxu0 %v1516
    %1594 = vmatpush2.bf16.msra.mxu0 %v1515
    %1595 = vmatprep.mubr.bf16.mxu0 %v1370
    %1596 = vmatmul.mubr.bf16.gmra.mxu0 %v1369
    %v1597 = vpop.f32.mrf.mxu0
    %v1598 = vadd.f32 0.0, %v1597
    %v1599 = vpop.f32.mrf.mxu0
    %v1600 = vadd.f32 0.0, %v1599
    %v1601 = vpop.f32.mrf.mxu0
    %v1602 = vpop.f32.mrf.mxu0
    %1603 = vdwg.mxu0
    %v1604 = vmul.f32 %v1598, %v885
    %v1605 = vmul.f32 %v1600, %v887
    %v1606 = vadd.f32 %v1604, %v885
    %v1607 = vadd.f32 %v1605, %v887
    %v1608 = vpack.c.bf16 %v1606, %v1606
    %v1609 = vpack.c.bf16 %v1607, %v1607
    %v1610 = vld [vmem:[#allocation11] sm:$0xff]
    %v1611 = vld [vmem:[#allocation11 + $0x8] sm:$0xff]
    %v1612 = vld [vmem:[#allocation11 + $0x10] sm:$0xff]
    %v1613 = vld [vmem:[#allocation11 + $0x18] sm:$0xff]
    %v1614 = vld [vmem:[#allocation11 + $0x20] sm:$0xff]
    %v1615 = vld [vmem:[#allocation11 + $0x28] sm:$0xff]
    %v1616 = vld [vmem:[#allocation11 + $0x30] sm:$0xff]
    %v1617 = vld [vmem:[#allocation11 + $0x38] sm:$0xff]
    %v1618 = vld [vmem:[#allocation11 + $0x40] sm:$0xff]
    %v1619 = vld [vmem:[#allocation11 + $0x48] sm:$0xff]
    %v1620 = vld [vmem:[#allocation11 + $0x50] sm:$0xff]
    %v1621 = vld [vmem:[#allocation11 + $0x58] sm:$0xff]
    %v1622 = vld [vmem:[#allocation11 + $0x60] sm:$0xff]
    %v1623 = vld [vmem:[#allocation11 + $0x68] sm:$0xff]
    %v1624 = vld [vmem:[#allocation11 + $0x70] sm:$0xff]
    %v1625 = vld [vmem:[#allocation11 + $0x78] sm:$0xff]
    %v1626 = vld [vmem:[#allocation11 + $0x80] sm:$0xff]
    %v1627 = vld [vmem:[#allocation11 + $0x88] sm:$0xff]
    %v1628 = vld [vmem:[#allocation11 + $0x90] sm:$0xff]
    %v1629 = vld [vmem:[#allocation11 + $0x98] sm:$0xff]
    %v1630 = vld [vmem:[#allocation11 + $0xa0] sm:$0xff]
    %v1631 = vld [vmem:[#allocation11 + $0xa8] sm:$0xff]
    %v1632 = vld [vmem:[#allocation11 + $0xb0] sm:$0xff]
    %v1633 = vld [vmem:[#allocation11 + $0xb8] sm:$0xff]
    %v1634 = vld [vmem:[#allocation11 + $0xc0] sm:$0xff]
    %v1635 = vld [vmem:[#allocation11 + $0xc8] sm:$0xff]
    %v1636 = vld [vmem:[#allocation11 + $0xd0] sm:$0xff]
    %v1637 = vld [vmem:[#allocation11 + $0xd8] sm:$0xff]
    %v1638 = vld [vmem:[#allocation11 + $0xe0] sm:$0xff]
    %v1639 = vld [vmem:[#allocation11 + $0xe8] sm:$0xff]
    %v1640 = vld [vmem:[#allocation11 + $0xf0] sm:$0xff]
    %v1641 = vld [vmem:[#allocation11 + $0xf8] sm:$0xff]
    %v1674 = vunpack.c.l.b16 %v1610
    %v1675 = vunpack.c.h.b16 %v1610
    %v1676 = vunpack.c.l.b16 %v1611
    %v1677 = vunpack.c.h.b16 %v1611
    %v1678 = vunpack.c.l.b16 %v1612
    %v1679 = vunpack.c.h.b16 %v1612
    %v1680 = vunpack.c.l.b16 %v1613
    %v1681 = vunpack.c.h.b16 %v1613
    %v1682 = vunpack.c.l.b16 %v1614
    %v1683 = vunpack.c.h.b16 %v1614
    %v1684 = vunpack.c.l.b16 %v1615
    %v1685 = vunpack.c.h.b16 %v1615
    %v1686 = vunpack.c.l.b16 %v1616
    %v1687 = vunpack.c.h.b16 %v1616
    %v1688 = vunpack.c.l.b16 %v1617
    %v1689 = vunpack.c.h.b16 %v1617
    %v1690 = vunpack.c.l.b16 %v1618
    %v1691 = vunpack.c.h.b16 %v1618
    %v1692 = vunpack.c.l.b16 %v1619
    %v1693 = vunpack.c.h.b16 %v1619
    %v1694 = vunpack.c.l.b16 %v1620
    %v1695 = vunpack.c.h.b16 %v1620
    %v1696 = vunpack.c.l.b16 %v1621
    %v1697 = vunpack.c.h.b16 %v1621
    %v1698 = vunpack.c.l.b16 %v1622
    %v1699 = vunpack.c.h.b16 %v1622
    %v1700 = vunpack.c.l.b16 %v1623
    %v1701 = vunpack.c.h.b16 %v1623
    %v1702 = vunpack.c.l.b16 %v1624
    %v1703 = vunpack.c.h.b16 %v1624
    %v1704 = vunpack.c.l.b16 %v1625
    %v1705 = vunpack.c.h.b16 %v1625
    %v1706 = vunpack.c.l.b16 %v1626
    %v1707 = vunpack.c.h.b16 %v1626
    %v1708 = vunpack.c.l.b16 %v1627
    %v1709 = vunpack.c.h.b16 %v1627
    %v1710 = vunpack.c.l.b16 %v1628
    %v1711 = vunpack.c.h.b16 %v1628
    %v1712 = vunpack.c.l.b16 %v1629
    %v1713 = vunpack.c.h.b16 %v1629
    %v1714 = vunpack.c.l.b16 %v1630
    %v1715 = vunpack.c.h.b16 %v1630
    %v1716 = vunpack.c.l.b16 %v1631
    %v1717 = vunpack.c.h.b16 %v1631
    %v1718 = vunpack.c.l.b16 %v1632
    %v1719 = vunpack.c.h.b16 %v1632
    %v1720 = vunpack.c.l.b16 %v1633
    %v1721 = vunpack.c.h.b16 %v1633
    %v1722 = vunpack.c.l.b16 %v1634
    %v1723 = vunpack.c.h.b16 %v1634
    %v1724 = vunpack.c.l.b16 %v1635
    %v1725 = vunpack.c.h.b16 %v1635
    %v1726 = vunpack.c.l.b16 %v1636
    %v1727 = vunpack.c.h.b16 %v1636
    %v1728 = vunpack.c.l.b16 %v1637
    %v1729 = vunpack.c.h.b16 %v1637
    %v1730 = vunpack.c.l.b16 %v1638
    %v1731 = vunpack.c.h.b16 %v1638
    %v1732 = vunpack.c.l.b16 %v1639
    %v1733 = vunpack.c.h.b16 %v1639
    %v1734 = vunpack.c.l.b16 %v1640
    %v1735 = vunpack.c.h.b16 %v1640
    %v1736 = vunpack.c.l.b16 %v1641
    %v1737 = vunpack.c.h.b16 %v1641
    %v1738 = vpack.c.b16 %v1676, %v1674
    %v1739 = vpack.c.b16 %v1677, %v1675
    %v1740 = vpack.c.b16 %v1680, %v1678
    %v1741 = vpack.c.b16 %v1681, %v1679
    %v1742 = vpack.c.b16 %v1684, %v1682
    %v1743 = vpack.c.b16 %v1685, %v1683
    %v1744 = vpack.c.b16 %v1688, %v1686
    %v1745 = vpack.c.b16 %v1689, %v1687
    %v1746 = vpack.c.b16 %v1692, %v1690
    %v1747 = vpack.c.b16 %v1693, %v1691
    %v1748 = vpack.c.b16 %v1696, %v1694
    %v1749 = vpack.c.b16 %v1697, %v1695
    %v1750 = vpack.c.b16 %v1700, %v1698
    %v1751 = vpack.c.b16 %v1701, %v1699
    %v1752 = vpack.c.b16 %v1704, %v1702
    %v1753 = vpack.c.b16 %v1705, %v1703
    %v1754 = vpack.c.b16 %v1708, %v1706
    %v1755 = vpack.c.b16 %v1709, %v1707
    %v1756 = vpack.c.b16 %v1712, %v1710
    %v1757 = vpack.c.b16 %v1713, %v1711
    %v1758 = vpack.c.b16 %v1716, %v1714
    %v1759 = vpack.c.b16 %v1717, %v1715
    %v1760 = vpack.c.b16 %v1720, %v1718
    %v1761 = vpack.c.b16 %v1721, %v1719
    %v1762 = vpack.c.b16 %v1724, %v1722
    %v1763 = vpack.c.b16 %v1725, %v1723
    %v1764 = vpack.c.b16 %v1728, %v1726
    %v1765 = vpack.c.b16 %v1729, %v1727
    %v1766 = vpack.c.b16 %v1732, %v1730
    %v1767 = vpack.c.b16 %v1733, %v1731
    %v1768 = vpack.c.b16 %v1736, %v1734
    %v1769 = vpack.c.b16 %v1737, %v1735
    %1802 = vmatprep.subr.bf16.mxu0 %v1753
    %1803 = vmatpush1.bf16.msra.mxu0 %v1752
    %1804 = vmatprep.subr.bf16.mxu0 %v1751
    %1805 = vmatpush1.bf16.msra.mxu0 %v1750
    %1806 = vmatprep.subr.bf16.mxu0 %v1749
    %1807 = vmatpush1.bf16.msra.mxu0 %v1748
    %1808 = vmatprep.subr.bf16.mxu0 %v1747
    %1809 = vmatpush1.bf16.msra.mxu0 %v1746
    %1810 = vmatprep.subr.bf16.mxu0 %v1745
    %1811 = vmatpush1.bf16.msra.mxu0 %v1744
    %1812 = vmatprep.subr.bf16.mxu0 %v1743
    %1813 = vmatpush1.bf16.msra.mxu0 %v1742
    %1814 = vmatprep.subr.bf16.mxu0 %v1741
    %1815 = vmatpush1.bf16.msra.mxu0 %v1740
    %1816 = vmatprep.subr.bf16.mxu0 %v1739
    %1817 = vmatpush1.bf16.msra.mxu0 %v1738
    %1818 = vmatprep.subr.bf16.mxu0 %v1769
    %1819 = vmatpush2.bf16.msra.mxu0 %v1768
    %1820 = vmatprep.subr.bf16.mxu0 %v1767
    %1821 = vmatpush2.bf16.msra.mxu0 %v1766
    %1822 = vmatprep.subr.bf16.mxu0 %v1765
    %1823 = vmatpush2.bf16.msra.mxu0 %v1764
    %1824 = vmatprep.subr.bf16.mxu0 %v1763
    %1825 = vmatpush2.bf16.msra.mxu0 %v1762
    %1826 = vmatprep.subr.bf16.mxu0 %v1761
    %1827 = vmatpush2.bf16.msra.mxu0 %v1760
    %1828 = vmatprep.subr.bf16.mxu0 %v1759
    %1829 = vmatpush2.bf16.msra.mxu0 %v1758
    %1830 = vmatprep.subr.bf16.mxu0 %v1757
    %1831 = vmatpush2.bf16.msra.mxu0 %v1756
    %1832 = vmatprep.subr.bf16.mxu0 %v1755
    %1833 = vmatpush2.bf16.msra.mxu0 %v1754
    %1834 = vmatprep.mubr.bf16.mxu0 %v1609
    %1835 = vmatmul.mubr.bf16.gmra.mxu0 %v1608
    %v1836 = vpop.f32.mrf.mxu0
    %v1837 = vadd.f32 0.0, %v1836
    %v1838 = vpop.f32.mrf.mxu0
    %v1839 = vadd.f32 0.0, %v1838
    %v1840 = vpop.f32.mrf.mxu0
    %v1841 = vpop.f32.mrf.mxu0
    %1842 = vdwg.mxu0
    %v1843 = vmul.f32 %v1837, %v885
    %v1844 = vmul.f32 %v1839, %v887
    %v1845 = vadd.f32 %v1843, %v885
    %v1846 = vadd.f32 %v1844, %v887
    %v1847 = vpack.c.bf16 %v1845, %v1845
    %v1848 = vpack.c.bf16 %v1846, %v1846
    %v1849 = vld [vmem:[#allocation13] sm:$0xf]
    %v1850 = vld [vmem:[#allocation13 + $0x4] sm:$0xf]
    %v1851 = vld [vmem:[#allocation13 + $0x8] sm:$0xf]
    %v1852 = vld [vmem:[#allocation13 + $0xc] sm:$0xf]
    %v1853 = vld [vmem:[#allocation13 + $0x10] sm:$0xf]
    %v1854 = vld [vmem:[#allocation13 + $0x14] sm:$0xf]
    %v1855 = vld [vmem:[#allocation13 + $0x18] sm:$0xf]
    %v1856 = vld [vmem:[#allocation13 + $0x1c] sm:$0xf]
    %v1857 = vld [vmem:[#allocation13 + $0x20] sm:$0xf]
    %v1858 = vld [vmem:[#allocation13 + $0x24] sm:$0xf]
    %v1859 = vld [vmem:[#allocation13 + $0x28] sm:$0xf]
    %v1860 = vld [vmem:[#allocation13 + $0x2c] sm:$0xf]
    %v1861 = vld [vmem:[#allocation13 + $0x30] sm:$0xf]
    %v1862 = vld [vmem:[#allocation13 + $0x34] sm:$0xf]
    %v1863 = vld [vmem:[#allocation13 + $0x38] sm:$0xf]
    %v1864 = vld [vmem:[#allocation13 + $0x3c] sm:$0xf]
    %v1865 = vld [vmem:[#allocation13 + $0x40] sm:$0xf]
    %v1866 = vld [vmem:[#allocation13 + $0x44] sm:$0xf]
    %v1867 = vld [vmem:[#allocation13 + $0x48] sm:$0xf]
    %v1868 = vld [vmem:[#allocation13 + $0x4c] sm:$0xf]
    %v1869 = vld [vmem:[#allocation13 + $0x50] sm:$0xf]
    %v1870 = vld [vmem:[#allocation13 + $0x54] sm:$0xf]
    %v1871 = vld [vmem:[#allocation13 + $0x58] sm:$0xf]
    %v1872 = vld [vmem:[#allocation13 + $0x5c] sm:$0xf]
    %v1873 = vld [vmem:[#allocation13 + $0x60] sm:$0xf]
    %v1874 = vld [vmem:[#allocation13 + $0x64] sm:$0xf]
    %v1875 = vld [vmem:[#allocation13 + $0x68] sm:$0xf]
    %v1876 = vld [vmem:[#allocation13 + $0x6c] sm:$0xf]
    %v1877 = vld [vmem:[#allocation13 + $0x70] sm:$0xf]
    %v1878 = vld [vmem:[#allocation13 + $0x74] sm:$0xf]
    %v1879 = vld [vmem:[#allocation13 + $0x78] sm:$0xf]
    %v1880 = vld [vmem:[#allocation13 + $0x7c] sm:$0xf]
    %v1913 = vunpack.c.l.b16 %v1849
    %v1914 = vunpack.c.l.b16 %v1850
    %v1915 = vunpack.c.l.b16 %v1851
    %v1916 = vunpack.c.l.b16 %v1852
    %v1917 = vunpack.c.l.b16 %v1853
    %v1918 = vunpack.c.l.b16 %v1854
    %v1919 = vunpack.c.l.b16 %v1855
    %v1920 = vunpack.c.l.b16 %v1856
    %v1921 = vunpack.c.l.b16 %v1857
    %v1922 = vunpack.c.l.b16 %v1858
    %v1923 = vunpack.c.l.b16 %v1859
    %v1924 = vunpack.c.l.b16 %v1860
    %v1925 = vunpack.c.l.b16 %v1861
    %v1926 = vunpack.c.l.b16 %v1862
    %v1927 = vunpack.c.l.b16 %v1863
    %v1928 = vunpack.c.l.b16 %v1864
    %v1929 = vunpack.c.l.b16 %v1865
    %v1930 = vunpack.c.l.b16 %v1866
    %v1931 = vunpack.c.l.b16 %v1867
    %v1932 = vunpack.c.l.b16 %v1868
    %v1933 = vunpack.c.l.b16 %v1869
    %v1934 = vunpack.c.l.b16 %v1870
    %v1935 = vunpack.c.l.b16 %v1871
    %v1936 = vunpack.c.l.b16 %v1872
    %v1937 = vunpack.c.l.b16 %v1873
    %v1938 = vunpack.c.l.b16 %v1874
    %v1939 = vunpack.c.l.b16 %v1875
    %v1940 = vunpack.c.l.b16 %v1876
    %v1941 = vunpack.c.l.b16 %v1877
    %v1942 = vunpack.c.l.b16 %v1878
    %v1943 = vunpack.c.l.b16 %v1879
    %v1944 = vunpack.c.l.b16 %v1880
    %v1945 = vpack.c.b16 %v1914, %v1913
    %v1946 = vpack.c.b16 %v1916, %v1915
    %v1947 = vpack.c.b16 %v1918, %v1917
    %v1948 = vpack.c.b16 %v1920, %v1919
    %v1949 = vpack.c.b16 %v1922, %v1921
    %v1950 = vpack.c.b16 %v1924, %v1923
    %v1951 = vpack.c.b16 %v1926, %v1925
    %v1952 = vpack.c.b16 %v1928, %v1927
    %v1953 = vpack.c.b16 %v1930, %v1929
    %v1954 = vpack.c.b16 %v1932, %v1931
    %v1955 = vpack.c.b16 %v1934, %v1933
    %v1956 = vpack.c.b16 %v1936, %v1935
    %v1957 = vpack.c.b16 %v1938, %v1937
    %v1958 = vpack.c.b16 %v1940, %v1939
    %v1959 = vpack.c.b16 %v1942, %v1941
    %v1960 = vpack.c.b16 %v1944, %v1943
    %1977 = vmatprep.subr.bf16.mxu0 0
    %1978 = vmatpush1.bf16.msra.mxu0 %v1952
    %1979 = vmatprep.subr.bf16.mxu0 0
    %1980 = vmatpush1.bf16.msra.mxu0 %v1951
    %1981 = vmatprep.subr.bf16.mxu0 0
    %1982 = vmatpush1.bf16.msra.mxu0 %v1950
    %1983 = vmatprep.subr.bf16.mxu0 0
    %1984 = vmatpush1.bf16.msra.mxu0 %v1949
    %1985 = vmatprep.subr.bf16.mxu0 0
    %1986 = vmatpush1.bf16.msra.mxu0 %v1948
    %1987 = vmatprep.subr.bf16.mxu0 0
    %1988 = vmatpush1.bf16.msra.mxu0 %v1947
    %1989 = vmatprep.subr.bf16.mxu0 0
    %1990 = vmatpush1.bf16.msra.mxu0 %v1946
    %1991 = vmatprep.subr.bf16.mxu0 0
    %1992 = vmatpush1.bf16.msra.mxu0 %v1945
    %1993 = vmatprep.subr.bf16.mxu0 0
    %1994 = vmatpush2.bf16.msra.mxu0 %v1960
    %1995 = vmatprep.subr.bf16.mxu0 0
    %1996 = vmatpush2.bf16.msra.mxu0 %v1959
    %1997 = vmatprep.subr.bf16.mxu0 0
    %1998 = vmatpush2.bf16.msra.mxu0 %v1958
    %1999 = vmatprep.subr.bf16.mxu0 0
    %2000 = vmatpush2.bf16.msra.mxu0 %v1957
    %2001 = vmatprep.subr.bf16.mxu0 0
    %2002 = vmatpush2.bf16.msra.mxu0 %v1956
    %2003 = vmatprep.subr.bf16.mxu0 0
    %2004 = vmatpush2.bf16.msra.mxu0 %v1955
    %2005 = vmatprep.subr.bf16.mxu0 0
    %2006 = vmatpush2.bf16.msra.mxu0 %v1954
    %2007 = vmatprep.subr.bf16.mxu0 0
    %2008 = vmatpush2.bf16.msra.mxu0 %v1953
    %2009 = vmatprep.mubr.bf16.mxu0 %v1848
    %2010 = vmatmul.mubr.bf16.gmra.mxu0 %v1847
    %v2011 = vpop.f32.mrf.mxu0
    %v2012 = vadd.f32 0.0, %v2011
    %v2013 = vpop.f32.mrf.mxu0
    %v2014 = vpop.f32.mrf.mxu0
    %v2015 = vpop.f32.mrf.mxu0
    %2016 = vdwg.mxu0
    %v2017 = vpack.c.bf16 %v2012, %v2012
    %2018 = vst [vmem:[#allocation14] sm:$0xf] %v2017
    // Predicated region
    $region58: #{densedd_forward.1} parent=1 // pred_check
      _
    $region59: #{densedd_forward.1} parent=1 // pred_check_branch
      %2020 = sbr.rel (0) target = $region61
    $region60: #{densedd_forward.1} parent=1 // pred_region
      %s2022 = ssub.s32 64, 64
      %2023 = vsyncadd [#allocation4], %s2022
      %s2025 = sshll.u32 [#allocation14], 4
      %s2026 = int_to_ptr.vmem [resolvable:$true] %s2025
      %2028 = dma.vmem_to_hbm [thread:$0]  %s2026, 64, %s7, [#allocation4]
    $region61: #{densedd_forward.1} parent=1 // pred_fallthru
      _
    // Predicated region
    $region62: #{densedd_forward.1} parent=1 // pred_check
      _
    $region63: #{densedd_forward.1} parent=1 // pred_check_branch
      %2030 = sbr.rel (0) target = $region65
    $region64: #{densedd_forward.1} parent=1 // pred_region
      %2031 = dma.done [#allocation4], 64
    $region65: #{densedd_forward.1} parent=1 // pred_fallthru
      _
    %2032 = vsyncpa [#allocation3], 1
    %2033 = vsyncpa [#allocation6], 1
    %2034 = vsyncpa [#allocation9], 1
    %2035 = vsyncpa [#allocation12], 1
    %2036 = vsyncpa [#allocation4], 1

</llo_original>
